<compile_context>
chip_gen: v7x
topology: tpu7x:2x2x1
jax: 0.10.0
libtpu: 0.0.40
codegen_flags: <defaults>
</compile_context>

<pallas_src>
import jax
import jax.numpy as jnp
from jax.experimental import pallas as pl
from jax.experimental.pallas import tpu as pltpu


_NEG_BIG = -1e30  # finite "-inf": keeps the running max finite even for fully masked tiles


def _weighted_mean_pool_kernel(x_ref, m_ref, wt_ref, b_ref, o_ref,
                               max_sc, den_sc, acc_sc):
    """One (bt, tl, D) tile of the online masked softmax-pool.

    x_ref  : (bt, tl, D) input tile, native dtype; edge tiles may be partial, so
             out-of-bounds rows hold stale-VMEM garbage and must stay masked.
    m_ref  : (bt, tl, 1) padding-mask tile in x.dtype, padded to the tile grid
             with zeros in the wrapper (trustworthy everywhere).
    wt_ref : (D, D)      encoder weight, pre-transposed (x @ W^T), native dtype.
    b_ref  : (1, D)      f32 encoder bias.
    o_ref  : (bt, 1, D)  pooled output (written on the last sequence tile).
    *_sc   : (bt, 1, D)  f32 running max / denominator / weighted-sum scratch.
    """
    li = pl.program_id(1)

    @pl.when(li == 0)
    def _init():
        max_sc[...] = jnp.full_like(max_sc, -jnp.inf)
        den_sc[...] = jnp.zeros_like(den_sc)
        acc_sc[...] = jnp.zeros_like(acc_sc)

    bt, tl, d = x_ref.shape
    x = x_ref[...]                                    # native dtype (f32 / bf16)
    keep = m_ref[...] != 0                            # (bt, tl, 1) bool, True = valid token

    # Linear layer: one (bt*tl, D) @ (D, D) MXU matmul with f32 accumulation.
    # (bt > 1 only for short-L shapes, where any reshape relayout is tiny.)
    logits = jnp.dot(x.reshape(bt * tl, d), wt_ref[...],
                     preferred_element_type=jnp.float32)
    logits = (logits + b_ref[...]).reshape(bt, tl, d)
    # Mask BEFORE the max: padded / OOB rows (possibly inf/NaN garbage) must not
    # drive the running max.
    logits = jnp.where(keep, logits, _NEG_BIG)

    # Online softmax over the sequence axis (axis=1), per feature column.
    tile_max = jnp.max(logits, axis=1, keepdims=True)          # (bt,1,D), finite
    m_new = jnp.maximum(max_sc[...], tile_max)                  # running max
    alpha = jnp.exp(max_sc[...] - m_new)                        # rescale old partial sums
    e = jnp.where(keep, jnp.exp(logits - m_new), 0.0)           # masked -> exactly 0
    den_sc[...] = alpha * den_sc[...] + jnp.sum(e, axis=1, keepdims=True)
    xe = jnp.where(keep, x.astype(jnp.float32) * e, 0.0)        # guard garbage x * 0
    acc_sc[...] = alpha * acc_sc[...] + jnp.sum(xe, axis=1, keepdims=True)
    max_sc[...] = m_new

    @pl.when(li == pl.num_programs(1) - 1)
    def _finalize():
        den = den_sc[...]
        inv = pl.reciprocal(den, approx=True)         # EUP fast path
        inv = inv * (2.0 - den * inv)                 # one Newton step -> ~f32 exact
        o_ref[...] = (acc_sc[...] * inv).astype(o_ref.dtype)


def _round_up(n, m):
    return -(-n // m) * m


def _vmem_budget_bytes():
    """~3/4 of physical VMEM (v7x 64 MiB -> 48, v5e/v6e 128 MiB -> 96)."""
    try:
        cap = int(pltpu.get_tpu_info().vmem_capacity_bytes)
    except Exception:  # query unavailable: assume the smallest (v7x, 64 MiB)
        cap = 64 * 1024 * 1024
    return max(32 * 1024 * 1024, min(3 * cap // 4, cap - 16 * 1024 * 1024))


def _select_tiles(B, L, D, x_bytes, m_bytes, w_bytes, budget, target_rows):
    """Largest sequence tile that fits the VMEM budget; bt*tl >= target_rows for
    MXU shape while keeping >= 2 batch grid steps for megacore / dual-TC."""
    fixed = D * D * w_bytes + 8 * D * 4              # resident W^T (1 buffer) + bias
    tl = min(2048, _round_up(max(L, 1), 8))
    while True:
        bt = max(1, target_rows // tl)
        if B >= 2:
            bt = min(bt, (B + 1) // 2)               # keep >= 2 "parallel" batch steps
        bt = min(bt, B)
        per_step = (2 * bt * tl * D * x_bytes        # x tile, double-buffered
                    + 2 * bt * tl * 128 * m_bytes    # mask tile (128-lane pad)
                    + 2 * bt * 8 * D * x_bytes       # output block
                    + 3 * bt * 8 * D * 4)            # f32 online-softmax scratch
        if fixed + per_step <= budget or tl <= 8:
            break
        tl = max(8, (tl // 2) // 8 * 8)              # halve, keep a multiple of 8
    if tl >= L:                                      # single L tile: block == full dim,
        tl = L                                       # no pad / OOB along L at all
    return bt, tl


def _build_call(out_dtype, B, D, bt, tl, nb, nl, vmem_limit, weight_buffers):
    resident = {}
    if weight_buffers is not None:
        # Grid-invariant blocks: single VMEM buffer instead of the default 2.
        resident = dict(pipeline_mode=pl.Buffered(weight_buffers))
    grid_spec = pltpu.PrefetchScalarGridSpec(
        num_scalar_prefetch=0,
        grid=(nb, nl),
        in_specs=[
            pl.BlockSpec((bt, tl, D), lambda bi, li: (bi, li, 0)),       # x tile
            pl.BlockSpec((bt, tl, 1), lambda bi, li: (bi, li, 0)),       # mask tile
            pl.BlockSpec((D, D), lambda bi, li: (0, 0), **resident),     # W^T (resident)
            pl.BlockSpec((1, D), lambda bi, li: (0, 0), **resident),     # bias (resident)
        ],
        out_specs=pl.BlockSpec((bt, 1, D), lambda bi, li: (bi, 0, 0)),
        scratch_shapes=[
            pltpu.VMEM((bt, 1, D), jnp.float32),   # running max
            pltpu.VMEM((bt, 1, D), jnp.float32),   # running denominator
            pltpu.VMEM((bt, 1, D), jnp.float32),   # running weighted sum
        ],
    )
    return pl.pallas_call(
        _weighted_mean_pool_kernel,
        out_shape=jax.ShapeDtypeStruct((B, 1, D), out_dtype),
        grid_spec=grid_spec,
        compiler_params=pltpu.CompilerParams(
            dimension_semantics=("parallel", "arbitrary"),
            vmem_limit_bytes=int(vmem_limit),
        ),
    )


def weighted_mean_pooling(x, padding_mask, enc_weight, enc_bias,
                          *, block_b=None, block_l=None, target_rows=256):
    """x: (B, L, D); padding_mask: (B, L) in {0,1}; enc_weight: (D, D) torch
    (out, in) layout; enc_bias: (D,).  Returns pooled (B, D) in x.dtype."""
    B, L, D = x.shape
    budget = _vmem_budget_bytes()

    w_t = enc_weight.T.astype(x.dtype)                  # native dtype for the MXU
    bias = enc_bias.astype(jnp.float32).reshape(1, D)   # softmax math stays f32
    mask = padding_mask.astype(x.dtype)[:, :, None]     # (B, L, 1), tiny vs x

    bt, tl = _select_tiles(B, L, D, x.dtype.itemsize, mask.dtype.itemsize,
                           w_t.dtype.itemsize, budget, target_rows)
    if block_l is not None:
        tl = block_l
    if block_b is not None:
        bt = block_b
    nb, nl = pl.cdiv(B, bt), pl.cdiv(L, tl)

    # x is tiled with a cdiv grid (no padded HBM copy of x).  Only the tiny mask
    # is padded to the tile grid so edge tiles see real zeros, never stale VMEM.
    Bp, Lp = nb * bt, nl * tl
    if (Bp, Lp) != (B, L):
        mask = jnp.pad(mask, ((0, Bp - B), (0, Lp - L), (0, 0)))

    try:
        out = _build_call(x.dtype, B, D, bt, tl, nb, nl, budget, 1)(x, mask, w_t, bias)
    except Exception:
        # pipeline_mode=pl.Buffered(1) unsupported on this jax version: fall back
        # to default buffering (blocks are grid-invariant, so still no re-DMA).
        out = _build_call(x.dtype, B, D, bt, tl, nb, nl, budget, None)(x, mask, w_t, bias)
    return out[:, 0, :]


def _reference(x, padding_mask, enc_weight, enc_bias):
    # Pure-JAX mirror of the PyTorch forward.
    logits = jnp.einsum("bld,od->blo",
                        x.astype(jnp.float32), enc_weight.astype(jnp.float32),
                        precision=jax.lax.Precision.HIGHEST)
    logits = logits + enc_bias.astype(jnp.float32)
    logits = jnp.where(padding_mask[..., None].astype(bool), logits, -jnp.inf)
    w = jax.nn.softmax(logits, axis=-2).astype(x.dtype)
    return (x * w).sum(-2)


if __name__ == "__main__":
    B, L, D = 2, 8, 32
    key = jax.random.PRNGKey(0)
    kx, kw, kb = jax.random.split(key, 3)

    x = jax.random.normal(kx, (B, L, D), dtype=jnp.float32)

    # Deterministic nn.Linear(D, D)-style init: U(-1/sqrt(D), 1/sqrt(D)).
    bound = 1.0 / (D ** 0.5)
    enc_weight = jax.random.uniform(kw, (D, D), minval=-bound, maxval=bound,
                                    dtype=jnp.float32)
    enc_bias = jax.random.uniform(kb, (D,), minval=-bound, maxval=bound,
                                  dtype=jnp.float32)

    # Padding mask: first row fully valid, second row has trailing padding.
    padding_mask = jnp.array(
        [[1] * L,
         [1] * (L - 3) + [0] * 3], dtype=jnp.int32)

    # float32 path.
    pooled = jax.block_until_ready(
        weighted_mean_pooling(x, padding_mask, enc_weight, enc_bias))
    ref = _reference(x, padding_mask, enc_weight, enc_bias)
    assert pooled.shape == (B, D)
    assert jnp.allclose(pooled, ref, atol=1e-4, rtol=1e-4), (pooled, ref)

    # bfloat16 path: native-dtype MXU matmul with f32 accumulation.
    xb = x.astype(jnp.bfloat16)
    wb = enc_weight.astype(jnp.bfloat16)
    pooled_bf16 = jax.block_until_ready(
        weighted_mean_pooling(xb, padding_mask, wb, enc_bias))
    ref_bf16 = _reference(xb, padding_mask, wb, enc_bias)
    assert pooled_bf16.shape == (B, D)
    assert jnp.allclose(pooled_bf16.astype(jnp.float32),
                        ref_bf16.astype(jnp.float32),
                        atol=2e-2, rtol=2e-2), (pooled_bf16, ref_bf16)

    # Ragged path: B=3 (partial batch edge block) and L=13 with block_l=8
    # (partial sequence edge block) — exercises the cdiv grid + in-kernel OOB masking.
    B3, L3 = 3, 13
    x3 = jax.random.normal(jax.random.PRNGKey(1), (B3, L3, D), dtype=jnp.float32)
    mask3 = jnp.array([[1] * L3,
                       [1] * 9 + [0] * (L3 - 9),
                       [1] * 5 + [0] * (L3 - 5)], dtype=jnp.int32)
    p3 = jax.block_until_ready(
        weighted_mean_pooling(x3, mask3, enc_weight, enc_bias, block_l=8))
    r3 = _reference(x3, mask3, enc_weight, enc_bias)
    assert p3.shape == (B3, D)
    assert jnp.allclose(p3, r3, atol=1e-4, rtol=1e-4), (p3, r3)

    print("KERNEL_OK")
</pallas_src>

<mosaic_0001>
module attributes {stable_mosaic.version = 11 : i64} {
  func.func @_weighted_mean_pool_kernel(%arg0: i32, %arg1: i32, %arg2: memref<1x8x32xf32, #tpu.memory_space<vmem>>, %arg3: memref<1x8x1xf32, #tpu.memory_space<vmem>>, %arg4: memref<32x32xf32, #tpu.memory_space<vmem>>, %arg5: memref<1x32xf32, #tpu.memory_space<vmem>>, %arg6: memref<1x1x32xf32, #tpu.memory_space<vmem>>, %arg7: memref<1x1x32xf32, #tpu.memory_space<vmem>>, %arg8: memref<1x1x32xf32, #tpu.memory_space<vmem>>, %arg9: memref<1x1x32xf32, #tpu.memory_space<vmem>>) attributes {dimension_semantics = [#tpu.dimension_semantics<parallel>, #tpu.dimension_semantics<arbitrary>], iteration_bounds = array<i64: 2, 1>, scalar_prefetch = 0 : i64, scratch_operands = 3 : i64, tpu.core_type = #tpu.core_type<tc>, window_params = [{transform_indices = @transform_0, window_bounds = array<i64: 1, 8, 32>}, {transform_indices = @transform_1, window_bounds = array<i64: 1, 8, 1>}, {pipeline_mode = #tpu.pipeline_mode<synchronous>, transform_indices = @transform_2, window_bounds = array<i64: 32, 32>}, {pipeline_mode = #tpu.pipeline_mode<synchronous>, transform_indices = @transform_3, window_bounds = array<i64: 1, 32>}, {transform_indices = @transform_4, window_bounds = array<i64: 1, 1, 32>}]} {
    %c0_i32 = arith.constant 0 : i32
    %0 = arith.cmpi eq, %arg1, %c0_i32 : i32
    %1 = arith.extui %0 : i1 to i32
    %c0_i32_0 = arith.constant 0 : i32
    %2 = arith.cmpi ne, %1, %c0_i32_0 : i32
    scf.if %2 {
      %cst_40 = arith.constant 0xFF800000 : f32
      %53 = vector.broadcast %cst_40 : f32 to vector<1x1x32xf32>
      %c0_41 = arith.constant 0 : index
      %c0_42 = arith.constant 0 : index
      %c0_43 = arith.constant 0 : index
      %54 = vector.load %arg7[%c0_41, %c0_42, %c0_43] : memref<1x1x32xf32, #tpu.memory_space<vmem>>, vector<1x1x32xf32>
      tpu.vector_store %arg7[%c0_41, %c0_42, %c0_43], %53 {strides = array<i32>} : memref<1x1x32xf32, #tpu.memory_space<vmem>>, vector<1x1x32xf32>,
      %cst_44 = arith.constant 0.000000e+00 : f32
      %55 = vector.broadcast %cst_44 : f32 to vector<1x1x32xf32>
      %c0_45 = arith.constant 0 : index
      %c0_46 = arith.constant 0 : index
      %c0_47 = arith.constant 0 : index
      %56 = vector.load %arg8[%c0_45, %c0_46, %c0_47] : memref<1x1x32xf32, #tpu.memory_space<vmem>>, vector<1x1x32xf32>
      tpu.vector_store %arg8[%c0_45, %c0_46, %c0_47], %55 {strides = array<i32>} : memref<1x1x32xf32, #tpu.memory_space<vmem>>, vector<1x1x32xf32>,
      %cst_48 = arith.constant 0.000000e+00 : f32
      %57 = vector.broadcast %cst_48 : f32 to vector<1x1x32xf32>
      %c0_49 = arith.constant 0 : index
      %c0_50 = arith.constant 0 : index
      %c0_51 = arith.constant 0 : index
      %58 = vector.load %arg9[%c0_49, %c0_50, %c0_51] : memref<1x1x32xf32, #tpu.memory_space<vmem>>, vector<1x1x32xf32>
      tpu.vector_store %arg9[%c0_49, %c0_50, %c0_51], %57 {strides = array<i32>} : memref<1x1x32xf32, #tpu.memory_space<vmem>>, vector<1x1x32xf32>,
    } else {
    }
    %c0 = arith.constant 0 : index
    %c0_1 = arith.constant 0 : index
    %c0_2 = arith.constant 0 : index
    %3 = vector.load %arg2[%c0, %c0_1, %c0_2] : memref<1x8x32xf32, #tpu.memory_space<vmem>>, vector<1x8x32xf32>
    %c0_3 = arith.constant 0 : index
    %c0_4 = arith.constant 0 : index
    %c0_5 = arith.constant 0 : index
    %4 = vector.load %arg3[%c0_3, %c0_4, %c0_5] : memref<1x8x1xf32, #tpu.memory_space<vmem>>, vector<1x8x1xf32>
    %cst = arith.constant 0.000000e+00 : f32
    %5 = vector.broadcast %cst : f32 to vector<1x8x1xf32>
    %6 = arith.cmpf one, %4, %5 : vector<1x8x1xf32>
    %7 = vector.shape_cast %3 : vector<1x8x32xf32> to vector<8x32xf32>
    %c0_6 = arith.constant 0 : index
    %c0_7 = arith.constant 0 : index
    %8 = vector.load %arg4[%c0_6, %c0_7] : memref<32x32xf32, #tpu.memory_space<vmem>>, vector<32x32xf32>
    %cst_8 = arith.constant dense<0.000000e+00> : vector<8x32xf32>
    %9 = tpu.matmul %7, %8, %cst_8 {dimension_numbers = #tpu.dot_dimension_numbers<[1], [0], [0], [1], [0, 0, 1, 1], [], []>} : vector<8x32xf32>, vector<32x32xf32>, vector<8x32xf32> -> vector<8x32xf32>
    %c0_9 = arith.constant 0 : index
    %c0_10 = arith.constant 0 : index
    %10 = vector.load %arg5[%c0_9, %c0_10] : memref<1x32xf32, #tpu.memory_space<vmem>>, vector<1x32xf32>
    %11 = vector.broadcast %10 : vector<1x32xf32> to vector<8x32xf32>
    %12 = arith.addf %9, %11 : vector<8x32xf32>
    %13 = vector.shape_cast %12 : vector<8x32xf32> to vector<1x8x32xf32>
    %cst_11 = arith.constant -1.000000e+30 : f32
    %14 = vector.shape_cast %6 : vector<1x8x1xi1> to vector<1x8x1xi1>
    %15 = vector.broadcast %14 : vector<1x8x1xi1> to vector<1x8x32xi1>
    %16 = vector.broadcast %cst_11 : f32 to vector<1x8x32xf32>
    %17 = arith.select %15, %13, %16 : vector<1x8x32xi1>, vector<1x8x32xf32>
    %cst_12 = arith.constant dense<0xFF800000> : vector<1x32xf32>
    %18 = vector.multi_reduction <maximumf>, %17, %cst_12 [1] : vector<1x8x32xf32> to vector<1x32xf32>
    %19 = vector.shape_cast %18 : vector<1x32xf32> to vector<1x1x32xf32>
    %c0_13 = arith.constant 0 : index
    %c0_14 = arith.constant 0 : index
    %c0_15 = arith.constant 0 : index
    %20 = vector.load %arg7[%c0_13, %c0_14, %c0_15] : memref<1x1x32xf32, #tpu.memory_space<vmem>>, vector<1x1x32xf32>
    %21 = arith.maximumf %20, %19 : vector<1x1x32xf32>
    %c0_16 = arith.constant 0 : index
    %c0_17 = arith.constant 0 : index
    %c0_18 = arith.constant 0 : index
    %22 = vector.load %arg7[%c0_16, %c0_17, %c0_18] : memref<1x1x32xf32, #tpu.memory_space<vmem>>, vector<1x1x32xf32>
    %23 = arith.subf %22, %21 : vector<1x1x32xf32>
    %24 = math.exp %23 : vector<1x1x32xf32>
    %25 = vector.broadcast %21 : vector<1x1x32xf32> to vector<1x8x32xf32>
    %26 = arith.subf %17, %25 : vector<1x8x32xf32>
    %27 = math.exp %26 : vector<1x8x32xf32>
    %cst_19 = arith.constant 0.000000e+00 : f32
    %28 = vector.shape_cast %6 : vector<1x8x1xi1> to vector<1x8x1xi1>
    %29 = vector.broadcast %28 : vector<1x8x1xi1> to vector<1x8x32xi1>
    %30 = vector.broadcast %cst_19 : f32 to vector<1x8x32xf32>
    %31 = arith.select %29, %27, %30 : vector<1x8x32xi1>, vector<1x8x32xf32>
    %c0_20 = arith.constant 0 : index
    %c0_21 = arith.constant 0 : index
    %c0_22 = arith.constant 0 : index
    %32 = vector.load %arg8[%c0_20, %c0_21, %c0_22] : memref<1x1x32xf32, #tpu.memory_space<vmem>>, vector<1x1x32xf32>
    %33 = arith.mulf %24, %32 : vector<1x1x32xf32>
    %cst_23 = arith.constant dense<0.000000e+00> : vector<1x32xf32>
    %34 = vector.multi_reduction <add>, %31, %cst_23 [1] : vector<1x8x32xf32> to vector<1x32xf32>
    %35 = vector.shape_cast %34 : vector<1x32xf32> to vector<1x1x32xf32>
    %36 = arith.addf %33, %35 : vector<1x1x32xf32>
    %c0_24 = arith.constant 0 : index
    %c0_25 = arith.constant 0 : index
    %c0_26 = arith.constant 0 : index
    %37 = vector.load %arg8[%c0_24, %c0_25, %c0_26] : memref<1x1x32xf32, #tpu.memory_space<vmem>>, vector<1x1x32xf32>
    tpu.vector_store %arg8[%c0_24, %c0_25, %c0_26], %36 {strides = array<i32>} : memref<1x1x32xf32, #tpu.memory_space<vmem>>, vector<1x1x32xf32>,
    %38 = arith.mulf %3, %31 : vector<1x8x32xf32>
    %cst_27 = arith.constant 0.000000e+00 : f32
    %39 = vector.shape_cast %6 : vector<1x8x1xi1> to vector<1x8x1xi1>
    %40 = vector.broadcast %39 : vector<1x8x1xi1> to vector<1x8x32xi1>
    %41 = vector.broadcast %cst_27 : f32 to vector<1x8x32xf32>
    %42 = arith.select %40, %38, %41 : vector<1x8x32xi1>, vector<1x8x32xf32>
    %c0_28 = arith.constant 0 : index
    %c0_29 = arith.constant 0 : index
    %c0_30 = arith.constant 0 : index
    %43 = vector.load %arg9[%c0_28, %c0_29, %c0_30] : memref<1x1x32xf32, #tpu.memory_space<vmem>>, vector<1x1x32xf32>
    %44 = arith.mulf %24, %43 : vector<1x1x32xf32>
    %cst_31 = arith.constant dense<0.000000e+00> : vector<1x32xf32>
    %45 = vector.multi_reduction <add>, %42, %cst_31 [1] : vector<1x8x32xf32> to vector<1x32xf32>
    %46 = vector.shape_cast %45 : vector<1x32xf32> to vector<1x1x32xf32>
    %47 = arith.addf %44, %46 : vector<1x1x32xf32>
    %c0_32 = arith.constant 0 : index
    %c0_33 = arith.constant 0 : index
    %c0_34 = arith.constant 0 : index
    %48 = vector.load %arg9[%c0_32, %c0_33, %c0_34] : memref<1x1x32xf32, #tpu.memory_space<vmem>>, vector<1x1x32xf32>
    tpu.vector_store %arg9[%c0_32, %c0_33, %c0_34], %47 {strides = array<i32>} : memref<1x1x32xf32, #tpu.memory_space<vmem>>, vector<1x1x32xf32>,
    %c0_35 = arith.constant 0 : index
    %c0_36 = arith.constant 0 : index
    %c0_37 = arith.constant 0 : index
    %49 = vector.load %arg7[%c0_35, %c0_36, %c0_37] : memref<1x1x32xf32, #tpu.memory_space<vmem>>, vector<1x1x32xf32>
    tpu.vector_store %arg7[%c0_35, %c0_36, %c0_37], %21 {strides = array<i32>} : memref<1x1x32xf32, #tpu.memory_space<vmem>>, vector<1x1x32xf32>,
    %c0_i32_38 = arith.constant 0 : i32
    %50 = arith.cmpi eq, %arg1, %c0_i32_38 : i32
    %51 = arith.extui %50 : i1 to i32
    %c0_i32_39 = arith.constant 0 : i32
    %52 = arith.cmpi ne, %51, %c0_i32_39 : i32
    scf.if %52 {
      %c0_40 = arith.constant 0 : index
      %c0_41 = arith.constant 0 : index
      %c0_42 = arith.constant 0 : index
      %53 = vector.load %arg8[%c0_40, %c0_41, %c0_42] : memref<1x1x32xf32, #tpu.memory_space<vmem>>, vector<1x1x32xf32>
      %54 = tpu.reciprocal %53 {approx = true} : vector<1x1x32xf32> -> vector<1x1x32xf32>
      %55 = arith.mulf %53, %54 : vector<1x1x32xf32>
      %cst_43 = arith.constant 2.000000e+00 : f32
      %56 = vector.broadcast %cst_43 : f32 to vector<1x1x32xf32>
      %57 = arith.subf %56, %55 : vector<1x1x32xf32>
      %58 = arith.mulf %54, %57 : vector<1x1x32xf32>
      %c0_44 = arith.constant 0 : index
      %c0_45 = arith.constant 0 : index
      %c0_46 = arith.constant 0 : index
      %59 = vector.load %arg9[%c0_44, %c0_45, %c0_46] : memref<1x1x32xf32, #tpu.memory_space<vmem>>, vector<1x1x32xf32>
      %60 = arith.mulf %59, %58 : vector<1x1x32xf32>
      %c0_47 = arith.constant 0 : index
      %c0_48 = arith.constant 0 : index
      %c0_49 = arith.constant 0 : index
      %61 = vector.load %arg6[%c0_47, %c0_48, %c0_49] : memref<1x1x32xf32, #tpu.memory_space<vmem>>, vector<1x1x32xf32>
      tpu.vector_store %arg6[%c0_47, %c0_48, %c0_49], %60 {strides = array<i32>} : memref<1x1x32xf32, #tpu.memory_space<vmem>>, vector<1x1x32xf32>,
    } else {
    }
    return
  }
  func.func @transform_0(%arg0: i32, %arg1: i32) -> (i32, i32, i32) {
    %c0_i32 = arith.constant 0 : i32
    %c0_i32_0 = arith.constant 0 : i32
    return %arg0, %arg1, %c0_i32 : i32, i32, i32
  }
  func.func @transform_1(%arg0: i32, %arg1: i32) -> (i32, i32, i32) {
    %c0_i32 = arith.constant 0 : i32
    %c0_i32_0 = arith.constant 0 : i32
    return %arg0, %arg1, %c0_i32 : i32, i32, i32
  }
  func.func @transform_2(%arg0: i32, %arg1: i32) -> (i32, i32) {
    %c0_i32 = arith.constant 0 : i32
    %c0_i32_0 = arith.constant 0 : i32
    %c0_i32_1 = arith.constant 0 : i32
    return %c0_i32, %c0_i32_0 : i32, i32
  }
  func.func @transform_3(%arg0: i32, %arg1: i32) -> (i32, i32) {
    %c0_i32 = arith.constant 0 : i32
    %c0_i32_0 = arith.constant 0 : i32
    %c0_i32_1 = arith.constant 0 : i32
    return %c0_i32, %c0_i32_0 : i32, i32
  }
  func.func @transform_4(%arg0: i32, %arg1: i32) -> (i32, i32, i32) {
    %c0_i32 = arith.constant 0 : i32
    %c0_i32_0 = arith.constant 0 : i32
    %c0_i32_1 = arith.constant 0 : i32
    return %arg0, %c0_i32, %c0_i32_0 : i32, i32, i32
  }
}

module attributes {stable_mosaic.version = 11 : i64} {
  func.func @_weighted_mean_pool_kernel(%arg0: i32, %arg1: i32, %arg2: memref<1x8x32xf32, #tpu.memory_space<vmem>>, %arg3: memref<1x8x1xf32, #tpu.memory_space<vmem>>, %arg4: memref<32x32xf32, #tpu.memory_space<vmem>>, %arg5: memref<1x32xf32, #tpu.memory_space<vmem>>, %arg6: memref<1x1x32xf32, #tpu.memory_space<vmem>>, %arg7: memref<1x1x32xf32, #tpu.memory_space<vmem>>, %arg8: memref<1x1x32xf32, #tpu.memory_space<vmem>>, %arg9: memref<1x1x32xf32, #tpu.memory_space<vmem>>) attributes {dimension_semantics = [#tpu.dimension_semantics<parallel>, #tpu.dimension_semantics<arbitrary>], iteration_bounds = array<i64: 2, 1>, scalar_prefetch = 0 : i64, scratch_operands = 3 : i64, tpu.core_type = #tpu.core_type<tc>, window_params = [{transform_indices = @transform_0, window_bounds = array<i64: 1, 8, 32>}, {transform_indices = @transform_1, window_bounds = array<i64: 1, 8, 1>}, {pipeline_mode = #tpu.pipeline_mode<synchronous>, transform_indices = @transform_2, window_bounds = array<i64: 32, 32>}, {pipeline_mode = #tpu.pipeline_mode<synchronous>, transform_indices = @transform_3, window_bounds = array<i64: 1, 32>}, {transform_indices = @transform_4, window_bounds = array<i64: 1, 1, 32>}]} {
    %c0_i32 = arith.constant 0 : i32
    %0 = arith.cmpi eq, %arg1, %c0_i32 : i32
    %1 = arith.extui %0 : i1 to i32
    %c0_i32_0 = arith.constant 0 : i32
    %2 = arith.cmpi ne, %1, %c0_i32_0 : i32
    scf.if %2 {
      %cst_40 = arith.constant 0xFF800000 : f32
      %53 = vector.broadcast %cst_40 : f32 to vector<1x1x32xf32>
      %c0_41 = arith.constant 0 : index
      %c0_42 = arith.constant 0 : index
      %c0_43 = arith.constant 0 : index
      %54 = vector.load %arg7[%c0_41, %c0_42, %c0_43] : memref<1x1x32xf32, #tpu.memory_space<vmem>>, vector<1x1x32xf32>
      tpu.vector_store %arg7[%c0_41, %c0_42, %c0_43], %53 {strides = array<i32>} : memref<1x1x32xf32, #tpu.memory_space<vmem>>, vector<1x1x32xf32>,
      %cst_44 = arith.constant 0.000000e+00 : f32
      %55 = vector.broadcast %cst_44 : f32 to vector<1x1x32xf32>
      %c0_45 = arith.constant 0 : index
      %c0_46 = arith.constant 0 : index
      %c0_47 = arith.constant 0 : index
      %56 = vector.load %arg8[%c0_45, %c0_46, %c0_47] : memref<1x1x32xf32, #tpu.memory_space<vmem>>, vector<1x1x32xf32>
      tpu.vector_store %arg8[%c0_45, %c0_46, %c0_47], %55 {strides = array<i32>} : memref<1x1x32xf32, #tpu.memory_space<vmem>>, vector<1x1x32xf32>,
      %cst_48 = arith.constant 0.000000e+00 : f32
      %57 = vector.broadcast %cst_48 : f32 to vector<1x1x32xf32>
      %c0_49 = arith.constant 0 : index
      %c0_50 = arith.constant 0 : index
      %c0_51 = arith.constant 0 : index
      %58 = vector.load %arg9[%c0_49, %c0_50, %c0_51] : memref<1x1x32xf32, #tpu.memory_space<vmem>>, vector<1x1x32xf32>
      tpu.vector_store %arg9[%c0_49, %c0_50, %c0_51], %57 {strides = array<i32>} : memref<1x1x32xf32, #tpu.memory_space<vmem>>, vector<1x1x32xf32>,
    } else {
    }
    %c0 = arith.constant 0 : index
    %c0_1 = arith.constant 0 : index
    %c0_2 = arith.constant 0 : index
    %3 = vector.load %arg2[%c0, %c0_1, %c0_2] : memref<1x8x32xf32, #tpu.memory_space<vmem>>, vector<1x8x32xf32>
    %c0_3 = arith.constant 0 : index
    %c0_4 = arith.constant 0 : index
    %c0_5 = arith.constant 0 : index
    %4 = vector.load %arg3[%c0_3, %c0_4, %c0_5] : memref<1x8x1xf32, #tpu.memory_space<vmem>>, vector<1x8x1xf32>
    %cst = arith.constant 0.000000e+00 : f32
    %5 = vector.broadcast %cst : f32 to vector<1x8x1xf32>
    %6 = arith.cmpf one, %4, %5 : vector<1x8x1xf32>
    %7 = vector.shape_cast %3 : vector<1x8x32xf32> to vector<8x32xf32>
    %c0_6 = arith.constant 0 : index
    %c0_7 = arith.constant 0 : index
    %8 = vector.load %arg4[%c0_6, %c0_7] : memref<32x32xf32, #tpu.memory_space<vmem>>, vector<32x32xf32>
    %cst_8 = arith.constant dense<0.000000e+00> : vector<8x32xf32>
    %9 = tpu.matmul %7, %8, %cst_8 {dimension_numbers = #tpu.dot_dimension_numbers<[1], [0], [0], [1], [0, 0, 1, 1], [], []>} : vector<8x32xf32>, vector<32x32xf32>, vector<8x32xf32> -> vector<8x32xf32>
    %c0_9 = arith.constant 0 : index
    %c0_10 = arith.constant 0 : index
    %10 = vector.load %arg5[%c0_9, %c0_10] : memref<1x32xf32, #tpu.memory_space<vmem>>, vector<1x32xf32>
    %11 = vector.broadcast %10 : vector<1x32xf32> to vector<8x32xf32>
    %12 = arith.addf %9, %11 : vector<8x32xf32>
    %13 = vector.shape_cast %12 : vector<8x32xf32> to vector<1x8x32xf32>
    %cst_11 = arith.constant -1.000000e+30 : f32
    %14 = vector.shape_cast %6 : vector<1x8x1xi1> to vector<1x8x1xi1>
    %15 = vector.broadcast %14 : vector<1x8x1xi1> to vector<1x8x32xi1>
    %16 = vector.broadcast %cst_11 : f32 to vector<1x8x32xf32>
    %17 = arith.select %15, %13, %16 : vector<1x8x32xi1>, vector<1x8x32xf32>
    %cst_12 = arith.constant dense<0xFF800000> : vector<1x32xf32>
    %18 = vector.multi_reduction <maximumf>, %17, %cst_12 [1] : vector<1x8x32xf32> to vector<1x32xf32>
    %19 = vector.shape_cast %18 : vector<1x32xf32> to vector<1x1x32xf32>
    %c0_13 = arith.constant 0 : index
    %c0_14 = arith.constant 0 : index
    %c0_15 = arith.constant 0 : index
    %20 = vector.load %arg7[%c0_13, %c0_14, %c0_15] : memref<1x1x32xf32, #tpu.memory_space<vmem>>, vector<1x1x32xf32>
    %21 = arith.maximumf %20, %19 : vector<1x1x32xf32>
    %c0_16 = arith.constant 0 : index
    %c0_17 = arith.constant 0 : index
    %c0_18 = arith.constant 0 : index
    %22 = vector.load %arg7[%c0_16, %c0_17, %c0_18] : memref<1x1x32xf32, #tpu.memory_space<vmem>>, vector<1x1x32xf32>
    %23 = arith.subf %22, %21 : vector<1x1x32xf32>
    %24 = math.exp %23 : vector<1x1x32xf32>
    %25 = vector.broadcast %21 : vector<1x1x32xf32> to vector<1x8x32xf32>
    %26 = arith.subf %17, %25 : vector<1x8x32xf32>
    %27 = math.exp %26 : vector<1x8x32xf32>
    %cst_19 = arith.constant 0.000000e+00 : f32
    %28 = vector.shape_cast %6 : vector<1x8x1xi1> to vector<1x8x1xi1>
    %29 = vector.broadcast %28 : vector<1x8x1xi1> to vector<1x8x32xi1>
    %30 = vector.broadcast %cst_19 : f32 to vector<1x8x32xf32>
    %31 = arith.select %29, %27, %30 : vector<1x8x32xi1>, vector<1x8x32xf32>
    %c0_20 = arith.constant 0 : index
    %c0_21 = arith.constant 0 : index
    %c0_22 = arith.constant 0 : index
    %32 = vector.load %arg8[%c0_20, %c0_21, %c0_22] : memref<1x1x32xf32, #tpu.memory_space<vmem>>, vector<1x1x32xf32>
    %33 = arith.mulf %24, %32 : vector<1x1x32xf32>
    %cst_23 = arith.constant dense<0.000000e+00> : vector<1x32xf32>
    %34 = vector.multi_reduction <add>, %31, %cst_23 [1] : vector<1x8x32xf32> to vector<1x32xf32>
    %35 = vector.shape_cast %34 : vector<1x32xf32> to vector<1x1x32xf32>
    %36 = arith.addf %33, %35 : vector<1x1x32xf32>
    %c0_24 = arith.constant 0 : index
    %c0_25 = arith.constant 0 : index
    %c0_26 = arith.constant 0 : index
    %37 = vector.load %arg8[%c0_24, %c0_25, %c0_26] : memref<1x1x32xf32, #tpu.memory_space<vmem>>, vector<1x1x32xf32>
    tpu.vector_store %arg8[%c0_24, %c0_25, %c0_26], %36 {strides = array<i32>} : memref<1x1x32xf32, #tpu.memory_space<vmem>>, vector<1x1x32xf32>,
    %38 = arith.mulf %3, %31 : vector<1x8x32xf32>
    %cst_27 = arith.constant 0.000000e+00 : f32
    %39 = vector.shape_cast %6 : vector<1x8x1xi1> to vector<1x8x1xi1>
    %40 = vector.broadcast %39 : vector<1x8x1xi1> to vector<1x8x32xi1>
    %41 = vector.broadcast %cst_27 : f32 to vector<1x8x32xf32>
    %42 = arith.select %40, %38, %41 : vector<1x8x32xi1>, vector<1x8x32xf32>
    %c0_28 = arith.constant 0 : index
    %c0_29 = arith.constant 0 : index
    %c0_30 = arith.constant 0 : index
    %43 = vector.load %arg9[%c0_28, %c0_29, %c0_30] : memref<1x1x32xf32, #tpu.memory_space<vmem>>, vector<1x1x32xf32>
    %44 = arith.mulf %24, %43 : vector<1x1x32xf32>
    %cst_31 = arith.constant dense<0.000000e+00> : vector<1x32xf32>
    %45 = vector.multi_reduction <add>, %42, %cst_31 [1] : vector<1x8x32xf32> to vector<1x32xf32>
    %46 = vector.shape_cast %45 : vector<1x32xf32> to vector<1x1x32xf32>
    %47 = arith.addf %44, %46 : vector<1x1x32xf32>
    %c0_32 = arith.constant 0 : index
    %c0_33 = arith.constant 0 : index
    %c0_34 = arith.constant 0 : index
    %48 = vector.load %arg9[%c0_32, %c0_33, %c0_34] : memref<1x1x32xf32, #tpu.memory_space<vmem>>, vector<1x1x32xf32>
    tpu.vector_store %arg9[%c0_32, %c0_33, %c0_34], %47 {strides = array<i32>} : memref<1x1x32xf32, #tpu.memory_space<vmem>>, vector<1x1x32xf32>,
    %c0_35 = arith.constant 0 : index
    %c0_36 = arith.constant 0 : index
    %c0_37 = arith.constant 0 : index
    %49 = vector.load %arg7[%c0_35, %c0_36, %c0_37] : memref<1x1x32xf32, #tpu.memory_space<vmem>>, vector<1x1x32xf32>
    tpu.vector_store %arg7[%c0_35, %c0_36, %c0_37], %21 {strides = array<i32>} : memref<1x1x32xf32, #tpu.memory_space<vmem>>, vector<1x1x32xf32>,
    %c0_i32_38 = arith.constant 0 : i32
    %50 = arith.cmpi eq, %arg1, %c0_i32_38 : i32
    %51 = arith.extui %50 : i1 to i32
    %c0_i32_39 = arith.constant 0 : i32
    %52 = arith.cmpi ne, %51, %c0_i32_39 : i32
    scf.if %52 {
      %c0_40 = arith.constant 0 : index
      %c0_41 = arith.constant 0 : index
      %c0_42 = arith.constant 0 : index
      %53 = vector.load %arg8[%c0_40, %c0_41, %c0_42] : memref<1x1x32xf32, #tpu.memory_space<vmem>>, vector<1x1x32xf32>
      %54 = tpu.reciprocal %53 {approx = true} : vector<1x1x32xf32> -> vector<1x1x32xf32>
      %55 = arith.mulf %53, %54 : vector<1x1x32xf32>
      %cst_43 = arith.constant 2.000000e+00 : f32
      %56 = vector.broadcast %cst_43 : f32 to vector<1x1x32xf32>
      %57 = arith.subf %56, %55 : vector<1x1x32xf32>
      %58 = arith.mulf %54, %57 : vector<1x1x32xf32>
      %c0_44 = arith.constant 0 : index
      %c0_45 = arith.constant 0 : index
      %c0_46 = arith.constant 0 : index
      %59 = vector.load %arg9[%c0_44, %c0_45, %c0_46] : memref<1x1x32xf32, #tpu.memory_space<vmem>>, vector<1x1x32xf32>
      %60 = arith.mulf %59, %58 : vector<1x1x32xf32>
      %c0_47 = arith.constant 0 : index
      %c0_48 = arith.constant 0 : index
      %c0_49 = arith.constant 0 : index
      %61 = vector.load %arg6[%c0_47, %c0_48, %c0_49] : memref<1x1x32xf32, #tpu.memory_space<vmem>>, vector<1x1x32xf32>
      tpu.vector_store %arg6[%c0_47, %c0_48, %c0_49], %60 {strides = array<i32>} : memref<1x1x32xf32, #tpu.memory_space<vmem>>, vector<1x1x32xf32>,
    } else {
    }
    return
  }
  func.func @transform_0(%arg0: i32, %arg1: i32) -> (i32, i32, i32) {
    %c0_i32 = arith.constant 0 : i32
    %c0_i32_0 = arith.constant 0 : i32
    return %arg0, %arg1, %c0_i32 : i32, i32, i32
  }
  func.func @transform_1(%arg0: i32, %arg1: i32) -> (i32, i32, i32) {
    %c0_i32 = arith.constant 0 : i32
    %c0_i32_0 = arith.constant 0 : i32
    return %arg0, %arg1, %c0_i32 : i32, i32, i32
  }
  func.func @transform_2(%arg0: i32, %arg1: i32) -> (i32, i32) {
    %c0_i32 = arith.constant 0 : i32
    %c0_i32_0 = arith.constant 0 : i32
    %c0_i32_1 = arith.constant 0 : i32
    return %c0_i32, %c0_i32_0 : i32, i32
  }
  func.func @transform_3(%arg0: i32, %arg1: i32) -> (i32, i32) {
    %c0_i32 = arith.constant 0 : i32
    %c0_i32_0 = arith.constant 0 : i32
    %c0_i32_1 = arith.constant 0 : i32
    return %c0_i32, %c0_i32_0 : i32, i32
  }
  func.func @transform_4(%arg0: i32, %arg1: i32) -> (i32, i32, i32) {
    %c0_i32 = arith.constant 0 : i32
    %c0_i32_0 = arith.constant 0 : i32
    %c0_i32_1 = arith.constant 0 : i32
    return %arg0, %c0_i32, %c0_i32_0 : i32, i32, i32
  }
}

</mosaic_0001>

<llo_original>
// kernel: tpu_custom_call.1
$region0: #{tpu_custom_call.1}
  #allocation0 [shape = 'u32[]', space=smem, size = 0x4, offset = 0x4, fixed_abs, tag = 'smem constant byte address 0x4 - core index']
  #allocation1 [shape = 'u32[144,128]{1,0:T(1,128)}', space=vmem, size = 0x12000, scoped, tag = 'internal scratch']
  #allocation2 [shape = 'f32[1,1,32]{2,1,0:T(1,128)}', space=vmem, size = 0x200, scoped, tag = 'scratch operand']
  #allocation3 [shape = 'f32[1,1,32]{2,1,0:T(1,128)}', space=vmem, size = 0x200, scoped, tag = 'scratch operand']
  #allocation4 [shape = 'f32[1,1,32]{2,1,0:T(1,128)}', space=vmem, size = 0x200, scoped, tag = 'scratch operand']
  %s0 = inlined_call_operand.vmem [shape: f32[2,8,32], index: 0, kind: input, shape index: {}]
  %s1 = inlined_call_operand.vmem [shape: f32[2,8,1], index: 1, kind: input, shape index: {}]
  %s2 = inlined_call_operand.hbm [shape: f32[32,32], index: 2, kind: input, shape index: {}]
  %s3 = inlined_call_operand.vmem [shape: f32[1,32], index: 3, kind: input, shape index: {}]
  %s4 = inlined_call_operand.hbm [shape: f32[2,1,32], index: 4, kind: output, shape index: {}]
  %s5 = sld [smem:[#allocation0]]
  $region61: #{tpu_custom_call.1} parent=0
    _
  %s7 = ssub.s32 1, %s5
  %s8 = scalar_select 0, %s7, %s5
  $region1: #{tpu_custom_call.1} parent=0
    #allocation5 [shape = 'u8[16384]{0}', space=vmem, size = 0x4000, scoped, tag = 'input window, operand 2, single buffered']
    #allocation6 [shape = 's32[2]{0}', space=sflag, size = 0x8, scoped, tag = 'scoped memory for tpu_custom_call.1']
    #allocation7 [shape = 's32[2]{0}', space=sflag, size = 0x8, scoped, tag = 'scoped memory for tpu_custom_call.1']
    #allocation8 [shape = 'u8[1024]{0}', space=vmem, size = 0x400, scoped, tag = 'output window, operand 0']
    %9 = vsyncpa [#allocation6], 0
    %10 = vsyncpa [#allocation7], 0
    %s11 = scalar_lea.sflag [#allocation7], 1
    %12 = vsyncpa %s11, 0
    loop: start=0, step=1, limit=4
    $region2: #{tpu_custom_call.1} parent=1 // loop_pre_header
      _
    $region3: #{tpu_custom_call.1} parent=1 // loop_header
      %s14 = sphi 0, %s18
      %p15 = scmp.ge.s32.totalorder %s14, 4
      %s21 = sphi 0, %s33
      %s22 = sphi 0, %s29
      %s23 = sphi 0, %s21
      %s24 = sphi 0, %s22
      %s25 = sphi 0, %s23
      %s26 = sphi 0, %s24
      %s38 = sphi 0, %s40
      %s41 = sphi 0, %s38
      %s42 = sphi 0, %s41
      %s58 = sphi 0, %s42
      %s66 = sphi 0, %s68
      %s69 = sphi 0, %s66
      %s70 = sphi 0, %s69
      %s86 = sphi 0, %s70
      %s90 = sphi 0, %s90
      %s92 = sphi 0, %s90
      %s93 = sphi 0, %s92
      %s107 = sphi 0, %s93
      %s111 = sphi 0, %s111
      %s113 = sphi 0, %s111
      %s114 = sphi 0, %s113
      %s128 = sphi 0, %s114
      %s134 = sphi 0, %s136
      %s137 = sphi 0, %s134
      %s138 = sphi 0, %s137
      %s154 = sphi 0, %s138
    $region4: #{tpu_custom_call.1} parent=1 // loop_header_branch
      %17 = sbr.rel (%p15) target = $region8
    $region5: #{tpu_custom_call.1} parent=1 // loop_body
      %s19 = ssub.s32 %s14, 1
      %s20 = ssub.s32 %s14, 2
      %s27 = sadd.s32 1, %s22
      %p28 = scmp.ge.s32.totalorder %s27, 1
      %s29 = scalar_select %p28, 0, %s27
      %s30 = sadd.s32 1, %s21
      %s31 = scalar_select %p28, %s30, %s21
      %p32 = scmp.ge.s32.totalorder %s31, 2
      %s33 = scalar_select %p32, 0, %s31
      %s34 = ssub.s32 %s21, %s33
      %s35 = ssub.s32 %s22, %s29
      %s36 = sor.u32 %s34, %s35
      %p37 = scmp.eq.s32.totalorder %s36, 0
      %s39 = sadd.s32 %s38, 1
      %s40 = scalar_select %p37, %s38, %s39
      %p43 = pneg %p37
      %p44 = scmp.eq.s32.totalorder %s14, 1
      %p45 = por %p43, %p44
      %p46 = scmp.ne.s32.totalorder %s38, %s41
      %p47 = scmp.eq.s32.totalorder %s14, 0
      %p48 = por %p46, %p47
      %p49 = scmp.ne.s32.totalorder %s38, %s41
      %p50 = scmp.eq.s32.totalorder %s19, 1
      %p51 = por %p49, %p50
      %p52 = scmp.ne.s32.totalorder %s41, %s42
      %p53 = scmp.eq.s32.totalorder %s19, 0
      %p54 = por %p52, %p53
      %p55 = scmp.ne.s32.totalorder %s41, %s42
      %p56 = scmp.eq.s32.totalorder %s20, 1
      %p57 = por %p55, %p56
      %p59 = scmp.ne.s32.totalorder %s42, %s58
      %p60 = scmp.eq.s32.totalorder %s20, 0
      %p61 = por %p59, %p60
      %s62 = ssub.s32 %s21, %s33
      %s63 = ssub.s32 %s22, %s29
      %s64 = sor.u32 %s62, %s63
      %p65 = scmp.eq.s32.totalorder %s64, 0
      %s67 = sadd.s32 %s66, 1
      %s68 = scalar_select %p65, %s66, %s67
      %p71 = pneg %p65
      %p72 = scmp.eq.s32.totalorder %s14, 1
      %p73 = por %p71, %p72
      %p74 = scmp.ne.s32.totalorder %s66, %s69
      %p75 = scmp.eq.s32.totalorder %s14, 0
      %p76 = por %p74, %p75
      %p77 = scmp.ne.s32.totalorder %s66, %s69
      %p78 = scmp.eq.s32.totalorder %s19, 1
      %p79 = por %p77, %p78
      %p80 = scmp.ne.s32.totalorder %s69, %s70
      %p81 = scmp.eq.s32.totalorder %s19, 0
      %p82 = por %p80, %p81
      %p83 = scmp.ne.s32.totalorder %s69, %s70
      %p84 = scmp.eq.s32.totalorder %s20, 1
      %p85 = por %p83, %p84
      %p87 = scmp.ne.s32.totalorder %s70, %s86
      %p88 = scmp.eq.s32.totalorder %s20, 0
      %p89 = por %p87, %p88
      %s91 = sadd.s32 %s90, 1
      %p94 = scmp.eq.s32.totalorder %s14, 1
      %p95 = scmp.ne.s32.totalorder %s90, %s92
      %p96 = scmp.eq.s32.totalorder %s14, 0
      %p97 = por %p95, %p96
      %p98 = scmp.ne.s32.totalorder %s90, %s92
      %p99 = scmp.eq.s32.totalorder %s19, 1
      %p100 = por %p98, %p99
      %p101 = scmp.ne.s32.totalorder %s92, %s93
      %p102 = scmp.eq.s32.totalorder %s19, 0
      %p103 = por %p101, %p102
      %p104 = scmp.ne.s32.totalorder %s92, %s93
      %p105 = scmp.eq.s32.totalorder %s20, 1
      %p106 = por %p104, %p105
      %p108 = scmp.ne.s32.totalorder %s93, %s107
      %p109 = scmp.eq.s32.totalorder %s20, 0
      %p110 = por %p108, %p109
      %s112 = sadd.s32 %s111, 1
      %p115 = scmp.eq.s32.totalorder %s14, 1
      %p116 = scmp.ne.s32.totalorder %s111, %s113
      %p117 = scmp.eq.s32.totalorder %s14, 0
      %p118 = por %p116, %p117
      %p119 = scmp.ne.s32.totalorder %s111, %s113
      %p120 = scmp.eq.s32.totalorder %s19, 1
      %p121 = por %p119, %p120
      %p122 = scmp.ne.s32.totalorder %s113, %s114
      %p123 = scmp.eq.s32.totalorder %s19, 0
      %p124 = por %p122, %p123
      %p125 = scmp.ne.s32.totalorder %s113, %s114
      %p126 = scmp.eq.s32.totalorder %s20, 1
      %p127 = por %p125, %p126
      %p129 = scmp.ne.s32.totalorder %s114, %s128
      %p130 = scmp.eq.s32.totalorder %s20, 0
      %p131 = por %p129, %p130
      %s132 = ssub.s32 %s21, %s33
      %p133 = scmp.eq.s32.totalorder %s132, 0
      %s135 = sadd.s32 %s134, 1
      %s136 = scalar_select %p133, %s134, %s135
      %p139 = pneg %p133
      %p140 = scmp.eq.s32.totalorder %s14, 1
      %p141 = por %p139, %p140
      %p142 = scmp.ne.s32.totalorder %s134, %s137
      %p143 = scmp.eq.s32.totalorder %s14, 0
      %p144 = por %p142, %p143
      %p145 = scmp.ne.s32.totalorder %s134, %s137
      %p146 = scmp.eq.s32.totalorder %s19, 1
      %p147 = por %p145, %p146
      %p148 = scmp.ne.s32.totalorder %s137, %s138
      %p149 = scmp.eq.s32.totalorder %s19, 0
      %p150 = por %p148, %p149
      %p151 = scmp.ne.s32.totalorder %s137, %s138
      %p152 = scmp.eq.s32.totalorder %s20, 1
      %p153 = por %p151, %p152
      %p155 = scmp.ne.s32.totalorder %s138, %s154
      %p156 = scmp.eq.s32.totalorder %s20, 0
      %p157 = por %p155, %p156
      %p158 = scmp.le.s32.totalorder 1, %s14
      %p159 = scmp.lt.s32.totalorder %s14, 3
      %p160 = pnand %p158, %p159
      %p161 = pneg %p160
      // Predicated region
      $region9: #{tpu_custom_call.1} parent=5 // pred_check
        _
      $region10: #{tpu_custom_call.1} parent=5 // pred_check_branch
        %163 = sbr.rel (%p160) target = $region12
      $region11: #{tpu_custom_call.1} parent=5 // pred_region
        %s164 = ssub.s32 %s14, 1
        // Predicated region
        $region13: #{tpu_custom_call.1} parent=11 // pred_check
          %p165 = pneg %p103
        $region14: #{tpu_custom_call.1} parent=11 // pred_check_branch
          %167 = sbr.rel (%p165) target = $region16
        $region15: #{tpu_custom_call.1} parent=11 // pred_region
          %s169 = ssub.s32 512, 512
          %170 = vsyncadd [#allocation6], %s169
          %s171 = sshll.u32 [#allocation5], 4
          %s172 = int_to_ptr.vmem [resolvable:$true] %s171
          %177 = dma.hbm_to_vmem [thread:$0]  %s2, 512, %s172, [#allocation6], 128, 128, 8
        $region16: #{tpu_custom_call.1} parent=11 // pred_fallthru
          _
        // Predicated region
        $region17: #{tpu_custom_call.1} parent=11 // pred_check
          %p178 = pneg %p124
        $region18: #{tpu_custom_call.1} parent=11 // pred_check_branch
          %180 = sbr.rel (%p178) target = $region20
        $region19: #{tpu_custom_call.1} parent=11 // pred_region
          _
        $region20: #{tpu_custom_call.1} parent=11 // pred_fallthru
          _
      $region12: #{tpu_custom_call.1} parent=5 // pred_fallthru
        _
      %p181 = scmp.lt.s32.totalorder %s14, 2
      // Predicated region
      $region21: #{tpu_custom_call.1} parent=5 // pred_check
        %p182 = pneg %p181
      $region22: #{tpu_custom_call.1} parent=5 // pred_check_branch
        %184 = sbr.rel (%p182) target = $region24
      $region23: #{tpu_custom_call.1} parent=5 // pred_region
        // Predicated region
        $region25: #{tpu_custom_call.1} parent=23 // pred_check
          %p185 = pneg %p48
        $region26: #{tpu_custom_call.1} parent=23 // pred_check_branch
          %187 = sbr.rel (%p185) target = $region28
        $region27: #{tpu_custom_call.1} parent=23 // pred_region
          %p188 = scmp.lt.s32.totalorder %s21, 1
          %s189 = scalar_select %p188, %s21, 1
          %p190 = scmp.lt.s32.totalorder %s22, 0
          %s191 = scalar_select %p190, %s22, 0
          %s192 = sadd.s32 %s191, %s189
          %s193 = smul.addr %s192, 8
          %s194 = scalar_lea.vmem %s0, %s193
        $region28: #{tpu_custom_call.1} parent=23 // pred_fallthru
          _
        // Predicated region
        $region29: #{tpu_custom_call.1} parent=23 // pred_check
          %p195 = pneg %p76
        $region30: #{tpu_custom_call.1} parent=23 // pred_check_branch
          %197 = sbr.rel (%p195) target = $region32
        $region31: #{tpu_custom_call.1} parent=23 // pred_region
          %p198 = scmp.lt.s32.totalorder %s21, 1
          %s199 = scalar_select %p198, %s21, 1
          %p200 = scmp.lt.s32.totalorder %s22, 0
          %s201 = scalar_select %p200, %s22, 0
          %s202 = sadd.s32 %s201, %s199
          %s203 = smul.addr %s202, 8
          %s204 = scalar_lea.vmem %s1, %s203
        $region32: #{tpu_custom_call.1} parent=23 // pred_fallthru
          _
      $region24: #{tpu_custom_call.1} parent=5 // pred_fallthru
        _
      %p205 = scmp.le.s32.totalorder 1, %s14
      %p206 = scmp.lt.s32.totalorder %s14, 3
      %p207 = pnand %p205, %p206
      %p208 = pneg %p207
      // Predicated region
      $region33: #{tpu_custom_call.1} parent=5 // pred_check
        _
      $region34: #{tpu_custom_call.1} parent=5 // pred_check_branch
        %210 = sbr.rel (%p207) target = $region36
      $region35: #{tpu_custom_call.1} parent=5 // pred_region
        %s211 = ssub.s32 %s14, 1
        // Predicated region
        $region37: #{tpu_custom_call.1} parent=35 // pred_check
          %p212 = pneg %p103
        $region38: #{tpu_custom_call.1} parent=35 // pred_check_branch
          %214 = sbr.rel (%p212) target = $region40
        $region39: #{tpu_custom_call.1} parent=35 // pred_region
          %215 = dma.done [#allocation6], 512
        $region40: #{tpu_custom_call.1} parent=35 // pred_fallthru
          _
        %p216 = scmp.lt.s32.totalorder %s23, 1
        %s217 = scalar_select %p216, %s23, 1
        %p218 = scmp.lt.s32.totalorder %s24, 0
        %s219 = scalar_select %p218, %s24, 0
        %s220 = sadd.s32 %s219, %s217
        %s221 = smul.addr %s220, 8
        %s222 = scalar_lea.vmem %s0, %s221
        %p223 = pneg %p54
        %p224 = pneg %p51
        %p225 = scmp.lt.s32.totalorder %s23, 1
        %s226 = scalar_select %p225, %s23, 1
        %p227 = scmp.lt.s32.totalorder %s24, 0
        %s228 = scalar_select %p227, %s24, 0
        %s229 = sadd.s32 %s228, %s226
        %s230 = smul.addr %s229, 8
        %s231 = scalar_lea.vmem %s1, %s230
        %p232 = pneg %p82
        %p233 = pneg %p79
        %p234 = pneg %p103
        %p235 = pneg %p100
        %p236 = pneg %p124
        %p237 = pneg %p121
        %p238 = pneg %p150
        %p239 = pneg %p147
        %s240 = sand.u32 %s137, 1
        %s241 = scalar_lea.sflag [#allocation7], %s240
        %s242 = sand.u32 %s137, 1
        %s243 = scalar_lea.vmem [#allocation8], %s242
        %p244 = scmp.lt.s32.totalorder %s23, 1
        %s245 = scalar_select %p244, %s23, 1
        %p246 = scmp.lt.s32.totalorder %s24, 0
        %s247 = scalar_select %p246, %s24, 0
        %s248 = sadd.s32 %s247, %s245
        %s249 = smul.addr %s248, 8
        %s250 = scalar_lea.vmem %s0, %s249
        %p251 = scmp.lt.s32.totalorder %s23, 1
        %s252 = scalar_select %p251, %s23, 1
        %p253 = scmp.lt.s32.totalorder %s24, 0
        %s254 = scalar_select %p253, %s24, 0
        %s255 = sadd.s32 %s254, %s252
        %s256 = smul.addr %s255, 8
        %s257 = scalar_lea.vmem %s1, %s256
        %p258 = scmp.eq.s32.totalorder %s24, 0
        // Predicated region
        $region41: #{tpu_custom_call.1} parent=35 // pred_check
          %p259 = pneg %p258
        $region42: #{tpu_custom_call.1} parent=35 // pred_check_branch
          %261 = sbr.rel (%p259) target = $region44
        $region43: #{tpu_custom_call.1} parent=35 // pred_region
          %vm262 = vcmask 253952
          %263 = vst.msk [vmem:[#allocation2] sm:$0x1] %vm262, -inf
          %264 = vst.msk [vmem:[#allocation3] sm:$0x1] %vm262, 0.0
          %265 = vst.msk [vmem:[#allocation4] sm:$0x1] %vm262, 0.0
        $region44: #{tpu_custom_call.1} parent=35 // pred_fallthru
          _
        %v266 = vld [vmem:[%s250] sm:$0xff]
        %v267 = vld [vmem:[%s257] sm:$0xff]
        %vm268 = vcmp.ne.f32.partialorder %v267, 0.0
        %v269 = vld [vmem:[#allocation5] sm:$0xff]
        %v270 = vld [vmem:[#allocation5 + $0x8] sm:$0xff]
        %v271 = vld [vmem:[#allocation5 + $0x10] sm:$0xff]
        %v272 = vld [vmem:[#allocation5 + $0x18] sm:$0xff]
        %v273 = vld [vmem:[%s3] sm:$0x1]
        %v275 = vlaneseq
        %v276 = vshrl.u32 %v275, 7
        %v277 = vsub.s32 0, %v276
        %v278 = vrot.slane %v273, %v277
        %vm280 = vcmask 261120
        %v282 = vsel %vm280, %v266, 0
        %284 = vmatprep.subr.mxu0 0.0
        %285 = vmatpush1.msra.mxu0 %v269
        %286 = vmatprep.subr.mxu0 0.0
        %287 = vmatpush1.msra.mxu0 %v270
        %288 = vmatprep.subr.mxu0 0.0
        %289 = vmatpush1.msra.mxu0 %v271
        %290 = vmatprep.subr.mxu0 0.0
        %291 = vmatpush1.msra.mxu0 %v272
        %292 = vmatprep.subr.mxu0 0.0
        %293 = vmatpush1.msra.mxu0 0.0
        %294 = vmatprep.subr.mxu0 0.0
        %295 = vmatpush1.msra.mxu0 0.0
        %296 = vmatprep.subr.mxu0 0.0
        %297 = vmatpush1.msra.mxu0 0.0
        %298 = vmatprep.subr.mxu0 0.0
        %299 = vmatpush1.msra.mxu0 0.0
        %300 = vmatprep.subr.mxu0 0.0
        %301 = vmatpush1.msra.mxu0 0.0
        %302 = vmatprep.subr.mxu0 0.0
        %303 = vmatpush1.msra.mxu0 0.0
        %304 = vmatprep.subr.mxu0 0.0
        %305 = vmatpush1.msra.mxu0 0.0
        %306 = vmatprep.subr.mxu0 0.0
        %307 = vmatpush1.msra.mxu0 0.0
        %308 = vmatprep.subr.mxu0 0.0
        %309 = vmatpush1.msra.mxu0 0.0
        %310 = vmatprep.subr.mxu0 0.0
        %311 = vmatpush1.msra.mxu0 0.0
        %312 = vmatprep.subr.mxu0 0.0
        %313 = vmatpush1.msra.mxu0 0.0
        %314 = vmatprep.subr.mxu0 0.0
        %315 = vmatpush1.msra.mxu0 0.0
        %316 = vmatprep.subr.mxu0 0.0
        %317 = vmatpush1.msra.mxu0 0.0
        %318 = vmatprep.subr.mxu0 0.0
        %319 = vmatpush1.msra.mxu0 0.0
        %320 = vmatprep.subr.mxu0 0.0
        %321 = vmatpush1.msra.mxu0 0.0
        %322 = vmatprep.subr.mxu0 0.0
        %323 = vmatpush1.msra.mxu0 0.0
        %324 = vmatprep.subr.mxu0 0.0
        %325 = vmatpush1.msra.mxu0 0.0
        %326 = vmatprep.subr.mxu0 0.0
        %327 = vmatpush1.msra.mxu0 0.0
        %328 = vmatprep.subr.mxu0 0.0
        %329 = vmatpush1.msra.mxu0 0.0
        %330 = vmatprep.subr.mxu0 0.0
        %331 = vmatpush1.msra.mxu0 0.0
        %332 = vmatprep.subr.mxu0 0.0
        %333 = vmatpush1.msra.mxu0 0.0
        %334 = vmatprep.subr.mxu0 0.0
        %335 = vmatpush1.msra.mxu0 0.0
        %336 = vmatprep.subr.mxu0 0.0
        %337 = vmatpush1.msra.mxu0 0.0
        %338 = vmatprep.subr.mxu0 0.0
        %339 = vmatpush1.msra.mxu0 0.0
        %340 = vmatprep.subr.mxu0 0.0
        %341 = vmatpush1.msra.mxu0 0.0
        %342 = vmatprep.subr.mxu0 0.0
        %343 = vmatpush1.msra.mxu0 0.0
        %344 = vmatprep.subr.mxu0 0.0
        %345 = vmatpush1.msra.mxu0 0.0
        %346 = vmatprep.subr.mxu0 0.0
        %347 = vmatpush1.msra.mxu0 0.0
        %348 = vmatprep.mubr.f32.mxu0 0.0
        %349 = vmatmul.mubr.f32.gmra.mrb[0].mxu0 %v282
        %v350 = vpop.f32.mrb[0].mxu0
        %v351 = vadd.f32 %v278, %v350
        %v352 = vpop.f32.mrb[0].mxu0
        %353 = vdwg.mxu0
        %v354 = vsel %vm268, 1, 0
        %355 = vset.pattern.permute.xlu0 0
        %356 = vperm.xlu0 %355, %v354
        %v357 = vpop.permute.xlu0 %356
        %vm358 = vcmp.eq.s32.totalorder %v357, 1
        %v359 = vsel %vm358, %v351, -1e+30
        %v360 = vsel %vm280, %v359, -inf
        %v361 = vrot.slane %v360, 4
        %v362 = vmax.f32 %v360, %v361
        %v363 = vrot.slane %v362, 2
        %v364 = vmax.f32 %v362, %v363
        %v365 = vrot.slane %v364, 1
        %v366 = vmax.f32 %v364, %v365
        %v367 = vld [vmem:[#allocation2] sm:$0x1]
        %v368 = vmax.f32 %v367, %v366
        %v369 = vsub.f32 %v367, %v368
        %v370 = vmul.f32 %v369, 1.442695
        %v371 = vpow.pop %v370
        %v373 = vlaneseq
        %v374 = vshrl.u32 %v373, 7
        %v375 = vsub.s32 0, %v374
        %v376 = vrot.slane %v368, %v375
        %v378 = vsub.f32 %v359, %v376
        %v379 = vmul.f32 %v378, 1.442695
        %v380 = vpow.pop %v379
        %v381 = vsel %vm358, %v380, 0.0
        %v382 = vld [vmem:[#allocation3] sm:$0x1]
        %v383 = vmul.f32 %v371, %v382
        %v384 = vsel %vm280, %v381, 0.0
        %v385 = vrot.slane %v384, 4
        %v386 = vadd.f32 %v384, %v385
        %v387 = vrot.slane %v386, 2
        %v388 = vadd.f32 %v386, %v387
        %v389 = vrot.slane %v388, 1
        %v390 = vadd.f32 %v388, %v389
        %v391 = vadd.f32 %v383, %v390
        %vm392 = vcmask 253952
        %393 = vst.msk [vmem:[#allocation3] sm:$0x1] %vm392, %v391
        %v394 = vmul.f32 %v266, %v381
        %v395 = vsel %vm358, %v394, 0.0
        %v396 = vld [vmem:[#allocation4] sm:$0x1]
        %v397 = vmul.f32 %v371, %v396
        %v398 = vsel %vm280, %v395, 0.0
        %v399 = vrot.slane %v398, 4
        %v400 = vadd.f32 %v398, %v399
        %v401 = vrot.slane %v400, 2
        %v402 = vadd.f32 %v400, %v401
        %v403 = vrot.slane %v402, 1
        %v404 = vadd.f32 %v402, %v403
        %v405 = vadd.f32 %v397, %v404
        %406 = vst.msk [vmem:[#allocation4] sm:$0x1] %vm392, %v405
        %407 = vst.msk [vmem:[#allocation2] sm:$0x1] %vm392, %v368
        // Predicated region
        $region45: #{tpu_custom_call.1} parent=35 // pred_check
          %p408 = pneg %p258
        $region46: #{tpu_custom_call.1} parent=35 // pred_check_branch
          %410 = sbr.rel (%p408) target = $region48
        $region47: #{tpu_custom_call.1} parent=35 // pred_region
          %v411 = vld [vmem:[#allocation3] sm:$0x1]
          %v412 = vrcp.pop %v411
          %v413 = vmul.f32 %v411, %v412
          %v414 = vsub.f32 2.0, %v413
          %v415 = vmul.f32 %v412, %v414
          %v416 = vld [vmem:[#allocation4] sm:$0x1]
          %v417 = vmul.f32 %v416, %v415
          %418 = vst.msk [vmem:[%s243] sm:$0x1] %vm392, %v417
        $region48: #{tpu_custom_call.1} parent=35 // pred_fallthru
          _
        %s419 = sand.u32 %s137, 1
        %s420 = scalar_lea.sflag [#allocation7], %s419
        %s421 = sand.u32 %s137, 1
        %s422 = scalar_lea.vmem [#allocation8], %s421
        // Predicated region
        $region49: #{tpu_custom_call.1} parent=35 // pred_check
          %p423 = pneg %p147
        $region50: #{tpu_custom_call.1} parent=35 // pred_check_branch
          %425 = sbr.rel (%p423) target = $region52
        $region51: #{tpu_custom_call.1} parent=35 // pred_region
          %s427 = ssub.s32 16, 16
          %428 = vsyncadd %s420, %s427
          %s429 = smul.addr %s23, 16
          %s430 = scalar_lea.hbm %s4, %s429
          %s432 = sshll.u32 %s422, 4
          %s433 = int_to_ptr.vmem [resolvable:$true] %s432
          %435 = dma.vmem_to_hbm [thread:$0]  %s433, 16, %s430, %s420
        $region52: #{tpu_custom_call.1} parent=35 // pred_fallthru
          _
      $region36: #{tpu_custom_call.1} parent=5 // pred_fallthru
        _
      %p436 = scmp.le.s32.totalorder 2, %s14
      // Predicated region
      $region53: #{tpu_custom_call.1} parent=5 // pred_check
        %p437 = pneg %p436
      $region54: #{tpu_custom_call.1} parent=5 // pred_check_branch
        %439 = sbr.rel (%p437) target = $region56
      $region55: #{tpu_custom_call.1} parent=5 // pred_region
        %s440 = ssub.s32 %s14, 2
        // Predicated region
        $region57: #{tpu_custom_call.1} parent=55 // pred_check
          %p441 = pneg %p153
        $region58: #{tpu_custom_call.1} parent=55 // pred_check_branch
          %443 = sbr.rel (%p441) target = $region60
        $region59: #{tpu_custom_call.1} parent=55 // pred_region
          %s444 = sand.u32 %s138, 1
          %s445 = scalar_lea.sflag [#allocation7], %s444
          %s446 = sand.u32 %s138, 1
          %s447 = scalar_lea.vmem [#allocation8], %s446
          %448 = dma.done %s445, 16
        $region60: #{tpu_custom_call.1} parent=55 // pred_fallthru
          _
      $region56: #{tpu_custom_call.1} parent=5 // pred_fallthru
        _
    $region6: #{tpu_custom_call.1} parent=1 // loop_footer
      %s18 = sadd.s32 1, %s14
    $region7: #{tpu_custom_call.1} parent=1 // loop_footer_branch
      %13 = sbr.rel target = $region3
    $region8: #{tpu_custom_call.1} parent=1 // loop_exit
      _
    %449 = vsyncpa [#allocation6], 1
    %s450 = scalar_lea.sflag [#allocation6], 1
    %451 = vsyncpa %s450, 1
    %452 = vsyncpa [#allocation7], 1
    %s453 = scalar_lea.sflag [#allocation7], 1
    %454 = vsyncpa %s453, 1

// kernel: tpu_custom_call.1
$region0: #{tpu_custom_call.1}
  #allocation0 [shape = 'u32[]', space=smem, size = 0x4, offset = 0x4, fixed_abs, tag = 'smem constant byte address 0x4 - core index']
  #allocation1 [shape = 'u32[144,128]{1,0:T(1,128)}', space=vmem, size = 0x12000, scoped, tag = 'internal scratch']
  #allocation2 [shape = 'f32[1,1,32]{2,1,0:T(1,128)}', space=vmem, size = 0x200, scoped, tag = 'scratch operand']
  #allocation3 [shape = 'f32[1,1,32]{2,1,0:T(1,128)}', space=vmem, size = 0x200, scoped, tag = 'scratch operand']
  #allocation4 [shape = 'f32[1,1,32]{2,1,0:T(1,128)}', space=vmem, size = 0x200, scoped, tag = 'scratch operand']
  %s0 = inlined_call_operand.vmem [shape: f32[2,8,32], index: 0, kind: input, shape index: {}]
  %s1 = inlined_call_operand.vmem [shape: f32[2,8,1], index: 1, kind: input, shape index: {}]
  %s2 = inlined_call_operand.hbm [shape: f32[32,32], index: 2, kind: input, shape index: {}]
  %s3 = inlined_call_operand.vmem [shape: f32[1,32], index: 3, kind: input, shape index: {}]
  %s4 = inlined_call_operand.hbm [shape: f32[2,1,32], index: 4, kind: output, shape index: {}]
  %s5 = sld [smem:[#allocation0]]
  $region61: #{tpu_custom_call.1} parent=0
    _
  %s7 = ssub.s32 1, %s5
  %s8 = scalar_select 0, %s7, %s5
  $region1: #{tpu_custom_call.1} parent=0
    #allocation5 [shape = 'u8[16384]{0}', space=vmem, size = 0x4000, scoped, tag = 'input window, operand 2, single buffered']
    #allocation6 [shape = 's32[2]{0}', space=sflag, size = 0x8, scoped, tag = 'scoped memory for tpu_custom_call.1']
    #allocation7 [shape = 's32[2]{0}', space=sflag, size = 0x8, scoped, tag = 'scoped memory for tpu_custom_call.1']
    #allocation8 [shape = 'u8[1024]{0}', space=vmem, size = 0x400, scoped, tag = 'output window, operand 0']
    %9 = vsyncpa [#allocation6], 0
    %10 = vsyncpa [#allocation7], 0
    %s11 = scalar_lea.sflag [#allocation7], 1
    %12 = vsyncpa %s11, 0
    loop: start=0, step=1, limit=4
    $region2: #{tpu_custom_call.1} parent=1 // loop_pre_header
      _
    $region3: #{tpu_custom_call.1} parent=1 // loop_header
      %s14 = sphi 0, %s18
      %p15 = scmp.ge.s32.totalorder %s14, 4
      %s21 = sphi 0, %s33
      %s22 = sphi 0, %s29
      %s23 = sphi 0, %s21
      %s24 = sphi 0, %s22
      %s25 = sphi 0, %s23
      %s26 = sphi 0, %s24
      %s38 = sphi 0, %s40
      %s41 = sphi 0, %s38
      %s42 = sphi 0, %s41
      %s58 = sphi 0, %s42
      %s66 = sphi 0, %s68
      %s69 = sphi 0, %s66
      %s70 = sphi 0, %s69
      %s86 = sphi 0, %s70
      %s90 = sphi 0, %s90
      %s92 = sphi 0, %s90
      %s93 = sphi 0, %s92
      %s107 = sphi 0, %s93
      %s111 = sphi 0, %s111
      %s113 = sphi 0, %s111
      %s114 = sphi 0, %s113
      %s128 = sphi 0, %s114
      %s134 = sphi 0, %s136
      %s137 = sphi 0, %s134
      %s138 = sphi 0, %s137
      %s154 = sphi 0, %s138
    $region4: #{tpu_custom_call.1} parent=1 // loop_header_branch
      %17 = sbr.rel (%p15) target = $region8
    $region5: #{tpu_custom_call.1} parent=1 // loop_body
      %s19 = ssub.s32 %s14, 1
      %s20 = ssub.s32 %s14, 2
      %s27 = sadd.s32 1, %s22
      %p28 = scmp.ge.s32.totalorder %s27, 1
      %s29 = scalar_select %p28, 0, %s27
      %s30 = sadd.s32 1, %s21
      %s31 = scalar_select %p28, %s30, %s21
      %p32 = scmp.ge.s32.totalorder %s31, 2
      %s33 = scalar_select %p32, 0, %s31
      %s34 = ssub.s32 %s21, %s33
      %s35 = ssub.s32 %s22, %s29
      %s36 = sor.u32 %s34, %s35
      %p37 = scmp.eq.s32.totalorder %s36, 0
      %s39 = sadd.s32 %s38, 1
      %s40 = scalar_select %p37, %s38, %s39
      %p43 = pneg %p37
      %p44 = scmp.eq.s32.totalorder %s14, 1
      %p45 = por %p43, %p44
      %p46 = scmp.ne.s32.totalorder %s38, %s41
      %p47 = scmp.eq.s32.totalorder %s14, 0
      %p48 = por %p46, %p47
      %p49 = scmp.ne.s32.totalorder %s38, %s41
      %p50 = scmp.eq.s32.totalorder %s19, 1
      %p51 = por %p49, %p50
      %p52 = scmp.ne.s32.totalorder %s41, %s42
      %p53 = scmp.eq.s32.totalorder %s19, 0
      %p54 = por %p52, %p53
      %p55 = scmp.ne.s32.totalorder %s41, %s42
      %p56 = scmp.eq.s32.totalorder %s20, 1
      %p57 = por %p55, %p56
      %p59 = scmp.ne.s32.totalorder %s42, %s58
      %p60 = scmp.eq.s32.totalorder %s20, 0
      %p61 = por %p59, %p60
      %s62 = ssub.s32 %s21, %s33
      %s63 = ssub.s32 %s22, %s29
      %s64 = sor.u32 %s62, %s63
      %p65 = scmp.eq.s32.totalorder %s64, 0
      %s67 = sadd.s32 %s66, 1
      %s68 = scalar_select %p65, %s66, %s67
      %p71 = pneg %p65
      %p72 = scmp.eq.s32.totalorder %s14, 1
      %p73 = por %p71, %p72
      %p74 = scmp.ne.s32.totalorder %s66, %s69
      %p75 = scmp.eq.s32.totalorder %s14, 0
      %p76 = por %p74, %p75
      %p77 = scmp.ne.s32.totalorder %s66, %s69
      %p78 = scmp.eq.s32.totalorder %s19, 1
      %p79 = por %p77, %p78
      %p80 = scmp.ne.s32.totalorder %s69, %s70
      %p81 = scmp.eq.s32.totalorder %s19, 0
      %p82 = por %p80, %p81
      %p83 = scmp.ne.s32.totalorder %s69, %s70
      %p84 = scmp.eq.s32.totalorder %s20, 1
      %p85 = por %p83, %p84
      %p87 = scmp.ne.s32.totalorder %s70, %s86
      %p88 = scmp.eq.s32.totalorder %s20, 0
      %p89 = por %p87, %p88
      %s91 = sadd.s32 %s90, 1
      %p94 = scmp.eq.s32.totalorder %s14, 1
      %p95 = scmp.ne.s32.totalorder %s90, %s92
      %p96 = scmp.eq.s32.totalorder %s14, 0
      %p97 = por %p95, %p96
      %p98 = scmp.ne.s32.totalorder %s90, %s92
      %p99 = scmp.eq.s32.totalorder %s19, 1
      %p100 = por %p98, %p99
      %p101 = scmp.ne.s32.totalorder %s92, %s93
      %p102 = scmp.eq.s32.totalorder %s19, 0
      %p103 = por %p101, %p102
      %p104 = scmp.ne.s32.totalorder %s92, %s93
      %p105 = scmp.eq.s32.totalorder %s20, 1
      %p106 = por %p104, %p105
      %p108 = scmp.ne.s32.totalorder %s93, %s107
      %p109 = scmp.eq.s32.totalorder %s20, 0
      %p110 = por %p108, %p109
      %s112 = sadd.s32 %s111, 1
      %p115 = scmp.eq.s32.totalorder %s14, 1
      %p116 = scmp.ne.s32.totalorder %s111, %s113
      %p117 = scmp.eq.s32.totalorder %s14, 0
      %p118 = por %p116, %p117
      %p119 = scmp.ne.s32.totalorder %s111, %s113
      %p120 = scmp.eq.s32.totalorder %s19, 1
      %p121 = por %p119, %p120
      %p122 = scmp.ne.s32.totalorder %s113, %s114
      %p123 = scmp.eq.s32.totalorder %s19, 0
      %p124 = por %p122, %p123
      %p125 = scmp.ne.s32.totalorder %s113, %s114
      %p126 = scmp.eq.s32.totalorder %s20, 1
      %p127 = por %p125, %p126
      %p129 = scmp.ne.s32.totalorder %s114, %s128
      %p130 = scmp.eq.s32.totalorder %s20, 0
      %p131 = por %p129, %p130
      %s132 = ssub.s32 %s21, %s33
      %p133 = scmp.eq.s32.totalorder %s132, 0
      %s135 = sadd.s32 %s134, 1
      %s136 = scalar_select %p133, %s134, %s135
      %p139 = pneg %p133
      %p140 = scmp.eq.s32.totalorder %s14, 1
      %p141 = por %p139, %p140
      %p142 = scmp.ne.s32.totalorder %s134, %s137
      %p143 = scmp.eq.s32.totalorder %s14, 0
      %p144 = por %p142, %p143
      %p145 = scmp.ne.s32.totalorder %s134, %s137
      %p146 = scmp.eq.s32.totalorder %s19, 1
      %p147 = por %p145, %p146
      %p148 = scmp.ne.s32.totalorder %s137, %s138
      %p149 = scmp.eq.s32.totalorder %s19, 0
      %p150 = por %p148, %p149
      %p151 = scmp.ne.s32.totalorder %s137, %s138
      %p152 = scmp.eq.s32.totalorder %s20, 1
      %p153 = por %p151, %p152
      %p155 = scmp.ne.s32.totalorder %s138, %s154
      %p156 = scmp.eq.s32.totalorder %s20, 0
      %p157 = por %p155, %p156
      %p158 = scmp.le.s32.totalorder 1, %s14
      %p159 = scmp.lt.s32.totalorder %s14, 3
      %p160 = pnand %p158, %p159
      %p161 = pneg %p160
      // Predicated region
      $region9: #{tpu_custom_call.1} parent=5 // pred_check
        _
      $region10: #{tpu_custom_call.1} parent=5 // pred_check_branch
        %163 = sbr.rel (%p160) target = $region12
      $region11: #{tpu_custom_call.1} parent=5 // pred_region
        %s164 = ssub.s32 %s14, 1
        // Predicated region
        $region13: #{tpu_custom_call.1} parent=11 // pred_check
          %p165 = pneg %p103
        $region14: #{tpu_custom_call.1} parent=11 // pred_check_branch
          %167 = sbr.rel (%p165) target = $region16
        $region15: #{tpu_custom_call.1} parent=11 // pred_region
          %s169 = ssub.s32 512, 512
          %170 = vsyncadd [#allocation6], %s169
          %s171 = sshll.u32 [#allocation5], 4
          %s172 = int_to_ptr.vmem [resolvable:$true] %s171
          %177 = dma.hbm_to_vmem [thread:$0]  %s2, 512, %s172, [#allocation6], 128, 128, 8
        $region16: #{tpu_custom_call.1} parent=11 // pred_fallthru
          _
        // Predicated region
        $region17: #{tpu_custom_call.1} parent=11 // pred_check
          %p178 = pneg %p124
        $region18: #{tpu_custom_call.1} parent=11 // pred_check_branch
          %180 = sbr.rel (%p178) target = $region20
        $region19: #{tpu_custom_call.1} parent=11 // pred_region
          _
        $region20: #{tpu_custom_call.1} parent=11 // pred_fallthru
          _
      $region12: #{tpu_custom_call.1} parent=5 // pred_fallthru
        _
      %p181 = scmp.lt.s32.totalorder %s14, 2
      // Predicated region
      $region21: #{tpu_custom_call.1} parent=5 // pred_check
        %p182 = pneg %p181
      $region22: #{tpu_custom_call.1} parent=5 // pred_check_branch
        %184 = sbr.rel (%p182) target = $region24
      $region23: #{tpu_custom_call.1} parent=5 // pred_region
        // Predicated region
        $region25: #{tpu_custom_call.1} parent=23 // pred_check
          %p185 = pneg %p48
        $region26: #{tpu_custom_call.1} parent=23 // pred_check_branch
          %187 = sbr.rel (%p185) target = $region28
        $region27: #{tpu_custom_call.1} parent=23 // pred_region
          %p188 = scmp.lt.s32.totalorder %s21, 1
          %s189 = scalar_select %p188, %s21, 1
          %p190 = scmp.lt.s32.totalorder %s22, 0
          %s191 = scalar_select %p190, %s22, 0
          %s192 = sadd.s32 %s191, %s189
          %s193 = smul.addr %s192, 8
          %s194 = scalar_lea.vmem %s0, %s193
        $region28: #{tpu_custom_call.1} parent=23 // pred_fallthru
          _
        // Predicated region
        $region29: #{tpu_custom_call.1} parent=23 // pred_check
          %p195 = pneg %p76
        $region30: #{tpu_custom_call.1} parent=23 // pred_check_branch
          %197 = sbr.rel (%p195) target = $region32
        $region31: #{tpu_custom_call.1} parent=23 // pred_region
          %p198 = scmp.lt.s32.totalorder %s21, 1
          %s199 = scalar_select %p198, %s21, 1
          %p200 = scmp.lt.s32.totalorder %s22, 0
          %s201 = scalar_select %p200, %s22, 0
          %s202 = sadd.s32 %s201, %s199
          %s203 = smul.addr %s202, 8
          %s204 = scalar_lea.vmem %s1, %s203
        $region32: #{tpu_custom_call.1} parent=23 // pred_fallthru
          _
      $region24: #{tpu_custom_call.1} parent=5 // pred_fallthru
        _
      %p205 = scmp.le.s32.totalorder 1, %s14
      %p206 = scmp.lt.s32.totalorder %s14, 3
      %p207 = pnand %p205, %p206
      %p208 = pneg %p207
      // Predicated region
      $region33: #{tpu_custom_call.1} parent=5 // pred_check
        _
      $region34: #{tpu_custom_call.1} parent=5 // pred_check_branch
        %210 = sbr.rel (%p207) target = $region36
      $region35: #{tpu_custom_call.1} parent=5 // pred_region
        %s211 = ssub.s32 %s14, 1
        // Predicated region
        $region37: #{tpu_custom_call.1} parent=35 // pred_check
          %p212 = pneg %p103
        $region38: #{tpu_custom_call.1} parent=35 // pred_check_branch
          %214 = sbr.rel (%p212) target = $region40
        $region39: #{tpu_custom_call.1} parent=35 // pred_region
          %215 = dma.done [#allocation6], 512
        $region40: #{tpu_custom_call.1} parent=35 // pred_fallthru
          _
        %p216 = scmp.lt.s32.totalorder %s23, 1
        %s217 = scalar_select %p216, %s23, 1
        %p218 = scmp.lt.s32.totalorder %s24, 0
        %s219 = scalar_select %p218, %s24, 0
        %s220 = sadd.s32 %s219, %s217
        %s221 = smul.addr %s220, 8
        %s222 = scalar_lea.vmem %s0, %s221
        %p223 = pneg %p54
        %p224 = pneg %p51
        %p225 = scmp.lt.s32.totalorder %s23, 1
        %s226 = scalar_select %p225, %s23, 1
        %p227 = scmp.lt.s32.totalorder %s24, 0
        %s228 = scalar_select %p227, %s24, 0
        %s229 = sadd.s32 %s228, %s226
        %s230 = smul.addr %s229, 8
        %s231 = scalar_lea.vmem %s1, %s230
        %p232 = pneg %p82
        %p233 = pneg %p79
        %p234 = pneg %p103
        %p235 = pneg %p100
        %p236 = pneg %p124
        %p237 = pneg %p121
        %p238 = pneg %p150
        %p239 = pneg %p147
        %s240 = sand.u32 %s137, 1
        %s241 = scalar_lea.sflag [#allocation7], %s240
        %s242 = sand.u32 %s137, 1
        %s243 = scalar_lea.vmem [#allocation8], %s242
        %p244 = scmp.lt.s32.totalorder %s23, 1
        %s245 = scalar_select %p244, %s23, 1
        %p246 = scmp.lt.s32.totalorder %s24, 0
        %s247 = scalar_select %p246, %s24, 0
        %s248 = sadd.s32 %s247, %s245
        %s249 = smul.addr %s248, 8
        %s250 = scalar_lea.vmem %s0, %s249
        %p251 = scmp.lt.s32.totalorder %s23, 1
        %s252 = scalar_select %p251, %s23, 1
        %p253 = scmp.lt.s32.totalorder %s24, 0
        %s254 = scalar_select %p253, %s24, 0
        %s255 = sadd.s32 %s254, %s252
        %s256 = smul.addr %s255, 8
        %s257 = scalar_lea.vmem %s1, %s256
        %p258 = scmp.eq.s32.totalorder %s24, 0
        // Predicated region
        $region41: #{tpu_custom_call.1} parent=35 // pred_check
          %p259 = pneg %p258
        $region42: #{tpu_custom_call.1} parent=35 // pred_check_branch
          %261 = sbr.rel (%p259) target = $region44
        $region43: #{tpu_custom_call.1} parent=35 // pred_region
          %vm262 = vcmask 253952
          %263 = vst.msk [vmem:[#allocation2] sm:$0x1] %vm262, -inf
          %264 = vst.msk [vmem:[#allocation3] sm:$0x1] %vm262, 0.0
          %265 = vst.msk [vmem:[#allocation4] sm:$0x1] %vm262, 0.0
        $region44: #{tpu_custom_call.1} parent=35 // pred_fallthru
          _
        %v266 = vld [vmem:[%s250] sm:$0xff]
        %v267 = vld [vmem:[%s257] sm:$0xff]
        %vm268 = vcmp.ne.f32.partialorder %v267, 0.0
        %v269 = vld [vmem:[#allocation5] sm:$0xff]
        %v270 = vld [vmem:[#allocation5 + $0x8] sm:$0xff]
        %v271 = vld [vmem:[#allocation5 + $0x10] sm:$0xff]
        %v272 = vld [vmem:[#allocation5 + $0x18] sm:$0xff]
        %v273 = vld [vmem:[%s3] sm:$0x1]
        %v275 = vlaneseq
        %v276 = vshrl.u32 %v275, 7
        %v277 = vsub.s32 0, %v276
        %v278 = vrot.slane %v273, %v277
        %vm280 = vcmask 261120
        %v282 = vsel %vm280, %v266, 0
        %284 = vmatprep.subr.mxu0 0.0
        %285 = vmatpush1.msra.mxu0 %v269
        %286 = vmatprep.subr.mxu0 0.0
        %287 = vmatpush1.msra.mxu0 %v270
        %288 = vmatprep.subr.mxu0 0.0
        %289 = vmatpush1.msra.mxu0 %v271
        %290 = vmatprep.subr.mxu0 0.0
        %291 = vmatpush1.msra.mxu0 %v272
        %292 = vmatprep.subr.mxu0 0.0
        %293 = vmatpush1.msra.mxu0 0.0
        %294 = vmatprep.subr.mxu0 0.0
        %295 = vmatpush1.msra.mxu0 0.0
        %296 = vmatprep.subr.mxu0 0.0
        %297 = vmatpush1.msra.mxu0 0.0
        %298 = vmatprep.subr.mxu0 0.0
        %299 = vmatpush1.msra.mxu0 0.0
        %300 = vmatprep.subr.mxu0 0.0
        %301 = vmatpush1.msra.mxu0 0.0
        %302 = vmatprep.subr.mxu0 0.0
        %303 = vmatpush1.msra.mxu0 0.0
        %304 = vmatprep.subr.mxu0 0.0
        %305 = vmatpush1.msra.mxu0 0.0
        %306 = vmatprep.subr.mxu0 0.0
        %307 = vmatpush1.msra.mxu0 0.0
        %308 = vmatprep.subr.mxu0 0.0
        %309 = vmatpush1.msra.mxu0 0.0
        %310 = vmatprep.subr.mxu0 0.0
        %311 = vmatpush1.msra.mxu0 0.0
        %312 = vmatprep.subr.mxu0 0.0
        %313 = vmatpush1.msra.mxu0 0.0
        %314 = vmatprep.subr.mxu0 0.0
        %315 = vmatpush1.msra.mxu0 0.0
        %316 = vmatprep.subr.mxu0 0.0
        %317 = vmatpush1.msra.mxu0 0.0
        %318 = vmatprep.subr.mxu0 0.0
        %319 = vmatpush1.msra.mxu0 0.0
        %320 = vmatprep.subr.mxu0 0.0
        %321 = vmatpush1.msra.mxu0 0.0
        %322 = vmatprep.subr.mxu0 0.0
        %323 = vmatpush1.msra.mxu0 0.0
        %324 = vmatprep.subr.mxu0 0.0
        %325 = vmatpush1.msra.mxu0 0.0
        %326 = vmatprep.subr.mxu0 0.0
        %327 = vmatpush1.msra.mxu0 0.0
        %328 = vmatprep.subr.mxu0 0.0
        %329 = vmatpush1.msra.mxu0 0.0
        %330 = vmatprep.subr.mxu0 0.0
        %331 = vmatpush1.msra.mxu0 0.0
        %332 = vmatprep.subr.mxu0 0.0
        %333 = vmatpush1.msra.mxu0 0.0
        %334 = vmatprep.subr.mxu0 0.0
        %335 = vmatpush1.msra.mxu0 0.0
        %336 = vmatprep.subr.mxu0 0.0
        %337 = vmatpush1.msra.mxu0 0.0
        %338 = vmatprep.subr.mxu0 0.0
        %339 = vmatpush1.msra.mxu0 0.0
        %340 = vmatprep.subr.mxu0 0.0
        %341 = vmatpush1.msra.mxu0 0.0
        %342 = vmatprep.subr.mxu0 0.0
        %343 = vmatpush1.msra.mxu0 0.0
        %344 = vmatprep.subr.mxu0 0.0
        %345 = vmatpush1.msra.mxu0 0.0
        %346 = vmatprep.subr.mxu0 0.0
        %347 = vmatpush1.msra.mxu0 0.0
        %348 = vmatprep.mubr.f32.mxu0 0.0
        %349 = vmatmul.mubr.f32.gmra.mrb[0].mxu0 %v282
        %v350 = vpop.f32.mrb[0].mxu0
        %v351 = vadd.f32 %v278, %v350
        %v352 = vpop.f32.mrb[0].mxu0
        %353 = vdwg.mxu0
        %v354 = vsel %vm268, 1, 0
        %355 = vset.pattern.permute.xlu0 0
        %356 = vperm.xlu0 %355, %v354
        %v357 = vpop.permute.xlu0 %356
        %vm358 = vcmp.eq.s32.totalorder %v357, 1
        %v359 = vsel %vm358, %v351, -1e+30
        %v360 = vsel %vm280, %v359, -inf
        %v361 = vrot.slane %v360, 4
        %v362 = vmax.f32 %v360, %v361
        %v363 = vrot.slane %v362, 2
        %v364 = vmax.f32 %v362, %v363
        %v365 = vrot.slane %v364, 1
        %v366 = vmax.f32 %v364, %v365
        %v367 = vld [vmem:[#allocation2] sm:$0x1]
        %v368 = vmax.f32 %v367, %v366
        %v369 = vsub.f32 %v367, %v368
        %v370 = vmul.f32 %v369, 1.442695
        %v371 = vpow.pop %v370
        %v373 = vlaneseq
        %v374 = vshrl.u32 %v373, 7
        %v375 = vsub.s32 0, %v374
        %v376 = vrot.slane %v368, %v375
        %v378 = vsub.f32 %v359, %v376
        %v379 = vmul.f32 %v378, 1.442695
        %v380 = vpow.pop %v379
        %v381 = vsel %vm358, %v380, 0.0
        %v382 = vld [vmem:[#allocation3] sm:$0x1]
        %v383 = vmul.f32 %v371, %v382
        %v384 = vsel %vm280, %v381, 0.0
        %v385 = vrot.slane %v384, 4
        %v386 = vadd.f32 %v384, %v385
        %v387 = vrot.slane %v386, 2
        %v388 = vadd.f32 %v386, %v387
        %v389 = vrot.slane %v388, 1
        %v390 = vadd.f32 %v388, %v389
        %v391 = vadd.f32 %v383, %v390
        %vm392 = vcmask 253952
        %393 = vst.msk [vmem:[#allocation3] sm:$0x1] %vm392, %v391
        %v394 = vmul.f32 %v266, %v381
        %v395 = vsel %vm358, %v394, 0.0
        %v396 = vld [vmem:[#allocation4] sm:$0x1]
        %v397 = vmul.f32 %v371, %v396
        %v398 = vsel %vm280, %v395, 0.0
        %v399 = vrot.slane %v398, 4
        %v400 = vadd.f32 %v398, %v399
        %v401 = vrot.slane %v400, 2
        %v402 = vadd.f32 %v400, %v401
        %v403 = vrot.slane %v402, 1
        %v404 = vadd.f32 %v402, %v403
        %v405 = vadd.f32 %v397, %v404
        %406 = vst.msk [vmem:[#allocation4] sm:$0x1] %vm392, %v405
        %407 = vst.msk [vmem:[#allocation2] sm:$0x1] %vm392, %v368
        // Predicated region
        $region45: #{tpu_custom_call.1} parent=35 // pred_check
          %p408 = pneg %p258
        $region46: #{tpu_custom_call.1} parent=35 // pred_check_branch
          %410 = sbr.rel (%p408) target = $region48
        $region47: #{tpu_custom_call.1} parent=35 // pred_region
          %v411 = vld [vmem:[#allocation3] sm:$0x1]
          %v412 = vrcp.pop %v411
          %v413 = vmul.f32 %v411, %v412
          %v414 = vsub.f32 2.0, %v413
          %v415 = vmul.f32 %v412, %v414
          %v416 = vld [vmem:[#allocation4] sm:$0x1]
          %v417 = vmul.f32 %v416, %v415
          %418 = vst.msk [vmem:[%s243] sm:$0x1] %vm392, %v417
        $region48: #{tpu_custom_call.1} parent=35 // pred_fallthru
          _
        %s419 = sand.u32 %s137, 1
        %s420 = scalar_lea.sflag [#allocation7], %s419
        %s421 = sand.u32 %s137, 1
        %s422 = scalar_lea.vmem [#allocation8], %s421
        // Predicated region
        $region49: #{tpu_custom_call.1} parent=35 // pred_check
          %p423 = pneg %p147
        $region50: #{tpu_custom_call.1} parent=35 // pred_check_branch
          %425 = sbr.rel (%p423) target = $region52
        $region51: #{tpu_custom_call.1} parent=35 // pred_region
          %s427 = ssub.s32 16, 16
          %428 = vsyncadd %s420, %s427
          %s429 = smul.addr %s23, 16
          %s430 = scalar_lea.hbm %s4, %s429
          %s432 = sshll.u32 %s422, 4
          %s433 = int_to_ptr.vmem [resolvable:$true] %s432
          %435 = dma.vmem_to_hbm [thread:$0]  %s433, 16, %s430, %s420
        $region52: #{tpu_custom_call.1} parent=35 // pred_fallthru
          _
      $region36: #{tpu_custom_call.1} parent=5 // pred_fallthru
        _
      %p436 = scmp.le.s32.totalorder 2, %s14
      // Predicated region
      $region53: #{tpu_custom_call.1} parent=5 // pred_check
        %p437 = pneg %p436
      $region54: #{tpu_custom_call.1} parent=5 // pred_check_branch
        %439 = sbr.rel (%p437) target = $region56
      $region55: #{tpu_custom_call.1} parent=5 // pred_region
        %s440 = ssub.s32 %s14, 2
        // Predicated region
        $region57: #{tpu_custom_call.1} parent=55 // pred_check
          %p441 = pneg %p153
        $region58: #{tpu_custom_call.1} parent=55 // pred_check_branch
          %443 = sbr.rel (%p441) target = $region60
        $region59: #{tpu_custom_call.1} parent=55 // pred_region
          %s444 = sand.u32 %s138, 1
          %s445 = scalar_lea.sflag [#allocation7], %s444
          %s446 = sand.u32 %s138, 1
          %s447 = scalar_lea.vmem [#allocation8], %s446
          %448 = dma.done %s445, 16
        $region60: #{tpu_custom_call.1} parent=55 // pred_fallthru
          _
      $region56: #{tpu_custom_call.1} parent=5 // pred_fallthru
        _
    $region6: #{tpu_custom_call.1} parent=1 // loop_footer
      %s18 = sadd.s32 1, %s14
    $region7: #{tpu_custom_call.1} parent=1 // loop_footer_branch
      %13 = sbr.rel target = $region3
    $region8: #{tpu_custom_call.1} parent=1 // loop_exit
      _
    %449 = vsyncpa [#allocation6], 1
    %s450 = scalar_lea.sflag [#allocation6], 1
    %451 = vsyncpa %s450, 1
    %452 = vsyncpa [#allocation7], 1
    %s453 = scalar_lea.sflag [#allocation7], 1
    %454 = vsyncpa %s453, 1

</llo_original>
